<compile_context>
chip_gen: v6e
topology: v6e:2x2x1
jax: 0.10.0
libtpu: 0.0.40
codegen_flags: <defaults>
</compile_context>

<pallas_src>
import jax
import jax.numpy as jnp
from jax.experimental import pallas as pl
from jax.experimental.pallas import tpu as pltpu


def _round_up(n, m):
    return ((n + m - 1) // m) * m


def _vmem_capacity_bytes():
    """Generation-aware VMEM capacity (falls back to the smallest, v7x)."""
    try:
        info = pltpu.get_tpu_info()
        cap = getattr(info, "vmem_capacity_bytes", None)
        if cap:
            return int(cap)
    except Exception:
        pass
    return 64 * 1024 * 1024


def _dae_kernel(x_ref, mask_ref,
                we0x_ref, we0m_ref, be0_ref,
                we1_ref, be1_ref,
                we2_ref, be2_ref,
                wd0_ref, bd0_ref,
                wd1_ref, bd1_ref,
                wd2_ref, bd2_ref,
                wm0_ref, bm0_ref,
                wm1_ref, bm1_ref,
                col_ref,
                constructed_ref, p_ref):
    f32 = jnp.float32
    bf16 = jnp.bfloat16

    # inputs arrive as bf16 streams; do the masking math in f32
    m = mask_ref[...].astype(f32)                      # (TB, D_pad)
    x = x_ref[...].astype(f32) * m                     # x = x * mask
    xb = x.astype(bf16)
    mb = m.astype(bf16)

    # ---- encoder ----
    # Linear(2*D -> E0) on concat([x, mask]) == x @ W0[:D] + mask @ W0[D:]
    h = (jnp.dot(xb, we0x_ref[...], preferred_element_type=f32)
         + jnp.dot(mb, we0m_ref[...], preferred_element_type=f32)
         + be0_ref[...])
    hb = jnp.maximum(h, 0.0).astype(bf16)              # fused ReLU + cast
    h = jnp.dot(hb, we1_ref[...], preferred_element_type=f32) + be1_ref[...]
    hb = jnp.maximum(h, 0.0).astype(bf16)
    latent = jnp.dot(hb, we2_ref[...], preferred_element_type=f32) + be2_ref[...]
    lb = jnp.maximum(latent, 0.0).astype(bf16)         # ReLU'd latent (shared)

    # ---- decoder ----
    d = jnp.dot(lb, wd0_ref[...], preferred_element_type=f32) + bd0_ref[...]
    db = jnp.maximum(d, 0.0).astype(bf16)
    d = jnp.dot(db, wd1_ref[...], preferred_element_type=f32) + bd1_ref[...]
    db = jnp.maximum(d, 0.0).astype(bf16)
    c = jnp.dot(db, wd2_ref[...], preferred_element_type=f32) + bd2_ref[...]

    # ---- per-column activations ----
    # pos -> ReLU, bool -> Sigmoid, categorical -> Softmax(dim=1) on a width-1
    # column == 1.0 (matches the PyTorch per-column split), else Identity.
    col = col_ref[...]                                  # (3, D_pad)
    pos, boo, cat = col[0:1, :], col[1:2, :], col[2:3, :]
    relu_c = jnp.maximum(c, 0.0)
    out = jnp.where(pos > 0.0, relu_c, c)
    out = jnp.where(boo > 0.0, jax.lax.logistic(c), out)   # EUP sigmoid
    out = jnp.where(cat > 0.0, 1.0, out)
    constructed_ref[...] = out.astype(constructed_ref.dtype)

    # ---- mlp head: Linear -> ReLU -> Linear -> Sigmoid (bf16, lane-dense) ----
    p = jnp.dot(lb, wm0_ref[...], preferred_element_type=f32) + bm0_ref[...]
    pb = jnp.maximum(p, 0.0).astype(bf16)
    p = jnp.dot(pb, wm1_ref[...], preferred_element_type=f32) + bm1_ref[...]
    p_ref[...] = jax.lax.logistic(p).astype(p_ref.dtype)


def dae_forward(x, mask, params, column_types):
    """Fused DAE forward pass as a batch-tiled Pallas kernel.

    Returns (constructed (batch, input_size) f32, p (batch, 1) f32).
    """
    batch, d = x.shape
    d_pad = _round_up(d, 128)

    # column-type masks packed into one (3, D_pad) operand (padded cols -> identity)
    pos = jnp.array([1.0 if t == "positive" else 0.0 for t in column_types], jnp.float32)
    boo = jnp.array([1.0 if t == "bool" else 0.0 for t in column_types], jnp.float32)
    cat = jnp.array([1.0 if t == "categorical" else 0.0 for t in column_types], jnp.float32)
    col = jnp.zeros((3, d_pad), jnp.float32)
    col = col.at[0, :d].set(pos).at[1, :d].set(boo).at[2, :d].set(cat)

    w_and_b = [
        params["we0x"], params["we0m"], params["be0"],
        params["we1"], params["be1"],
        params["we2"], params["be2"],
        params["wd0"], params["bd0"],
        params["wd1"], params["bd1"],
        params["wd2"], params["bd2"],
        params["wm0"], params["bm0"],
        params["wm1"], params["bm1"],
    ]
    w_bytes = sum(int(a.size) * a.dtype.itemsize for a in w_and_b) + int(col.size) * 4

    # ---- generation-aware VMEM budget ----
    vmem_cap = _vmem_capacity_bytes()                 # 128 MiB v5e/v6e, 64 MiB v7x
    vmem_limit = int(vmem_cap * 0.90)
    budget = int(vmem_limit * 0.75)                   # headroom for compiler scratch

    # per-row bytes: double-buffered I/O blocks + f32/bf16 intermediate activations
    widths = [params[k].shape[-1]
              for k in ("we0x", "we1", "we2", "wd0", "wd1", "wd2", "wm0", "wm1")]
    scratch_per_row = 6 * sum(widths)                 # f32 + bf16 copy per layer (conservative)
    io_per_row = (2 * (2 * d_pad * 2)                 # x + mask, bf16, double-buffered
                  + 2 * (d_pad * 4)                   # constructed, f32, double-buffered
                  + 2 * (128 * 2))                    # p, bf16, double-buffered
    per_row = io_per_row + scratch_per_row

    # resident weights are double-buffered by the pipeline -> account 2x
    avail = max(budget - 2 * w_bytes, 8 * per_row)
    tb_cap = max(8, (avail // per_row) // 8 * 8)

    # guarantee >= 2 grid steps when batch allows (keeps both v7x TCs busy)
    half = _round_up((batch + 1) // 2, 8) if batch > 8 else _round_up(batch, 8)
    tb = max(8, int(min(1024, tb_cap, half)))

    # prefer a tile that divides batch exactly (avoids padding the batch axis)
    if batch % 8 == 0:
        for cand in range(tb, 7, -8):
            if batch % cand == 0:
                tb = cand
                break

    pb_rows = _round_up(batch, tb)
    need_pad = (pb_rows != batch) or (d_pad != d)
    if need_pad:
        # single fused pad+cast pass
        x_p = jnp.zeros((pb_rows, d_pad), jnp.bfloat16).at[:batch, :d].set(
            x.astype(jnp.bfloat16))
        m_p = jnp.zeros((pb_rows, d_pad), jnp.bfloat16).at[:batch, :d].set(
            mask.astype(jnp.bfloat16))
    else:
        # zero-copy path (no wrapper-side HBM pass when inputs are already bf16)
        x_p = x.astype(jnp.bfloat16)
        m_p = mask.astype(jnp.bfloat16)

    def tile_spec(shape):
        return pl.BlockSpec(shape, lambda i: (i, 0))

    def resident_spec(arr):
        return pl.BlockSpec(arr.shape, lambda i: (0, 0))

    inputs = (x_p, m_p, *w_and_b, col)
    in_specs = ([tile_spec((tb, d_pad)), tile_spec((tb, d_pad))]
                + [resident_spec(a) for a in w_and_b]
                + [resident_spec(col)])

    out_shapes = (
        jax.ShapeDtypeStruct((pb_rows, d_pad), jnp.float32),   # constructed (f32 for accuracy)
        jax.ShapeDtypeStruct((pb_rows, 128), jnp.bfloat16),    # p (lane-dense, bf16; col 0 real)
    )
    out_specs = (tile_spec((tb, d_pad)), tile_spec((tb, 128)))

    # advisory cost estimate: matmul flops, sigmoid transcendentals, real HBM streams
    mm_flops = 0
    for wkey in ("we0x", "we0m", "we1", "we2", "wd0", "wd1", "wd2", "wm0", "wm1"):
        kk, nn = params[wkey].shape
        mm_flops += 2 * pb_rows * int(kk) * int(nn)
    bytes_accessed = (int(x_p.size) * 2 + int(m_p.size) * 2 + w_bytes
                      + pb_rows * d_pad * 4 + pb_rows * 128 * 2)
    cost = pl.CostEstimate(flops=int(mm_flops),
                           transcendentals=int(pb_rows * (d_pad + 128)),
                           bytes_accessed=int(bytes_accessed))

    constructed_p, p_p = pl.pallas_call(
        _dae_kernel,
        out_shape=out_shapes,
        grid=(pb_rows // tb,),
        in_specs=in_specs,
        out_specs=out_specs,
        compiler_params=pltpu.CompilerParams(
            dimension_semantics=("parallel",),
            vmem_limit_bytes=vmem_limit,
        ),
        cost_estimate=cost,
    )(*inputs)

    constructed = constructed_p[:batch, :d]
    p = p_p[:batch, 0:1].astype(jnp.float32)
    return constructed, p


def init_params(key, input_size, latent_dim, encoder_units, decoder_units,
                mlp_hidden=100):
    """Deterministic synthetic parameters.

    Linear weights are stored (in, out), zero-padded to multiples of 128 on
    both feature axes, and cast to bf16 for the MXU; biases stay f32, padded
    on the lane axis. The first encoder weight is split (x-half / mask-half)
    for the fused concat-matmul.
    """
    d_pad = _round_up(input_size, 128)
    e0, e1 = encoder_units
    d0, d1 = decoder_units
    e0p, e1p = _round_up(e0, 128), _round_up(e1, 128)
    latp = _round_up(latent_dim, 128)
    d0p, d1p = _round_up(d0, 128), _round_up(d1, 128)
    mlpp = _round_up(mlp_hidden, 128)

    def lin(k, fi, fo, fip, fop):
        kw, kb = jax.random.split(k)
        w = jax.random.normal(kw, (fi, fo), jnp.float32) * 0.1
        b = jax.random.normal(kb, (1, fo), jnp.float32) * 0.1
        wp = jnp.zeros((fip, fop), jnp.bfloat16).at[:fi, :fo].set(w.astype(jnp.bfloat16))
        bp = jnp.zeros((1, fop), jnp.float32).at[:, :fo].set(b)
        return wp, bp

    keys = jax.random.split(key, 8)

    # first encoder layer: Linear(2*input_size -> e0), split across x / mask halves
    kw, kb = jax.random.split(keys[0])
    w0 = jax.random.normal(kw, (2 * input_size, e0), jnp.float32) * 0.1
    b0 = jax.random.normal(kb, (1, e0), jnp.float32) * 0.1
    we0x = jnp.zeros((d_pad, e0p), jnp.bfloat16).at[:input_size, :e0].set(
        w0[:input_size].astype(jnp.bfloat16))
    we0m = jnp.zeros((d_pad, e0p), jnp.bfloat16).at[:input_size, :e0].set(
        w0[input_size:].astype(jnp.bfloat16))
    be0 = jnp.zeros((1, e0p), jnp.float32).at[:, :e0].set(b0)

    we1, be1 = lin(keys[1], e0, e1, e0p, e1p)
    we2, be2 = lin(keys[2], e1, latent_dim, e1p, latp)
    wd0, bd0 = lin(keys[3], latent_dim, d0, latp, d0p)
    wd1, bd1 = lin(keys[4], d0, d1, d0p, d1p)
    wd2, bd2 = lin(keys[5], d1, input_size, d1p, d_pad)
    wm0, bm0 = lin(keys[6], latent_dim, mlp_hidden, latp, mlpp)
    wm1, bm1 = lin(keys[7], mlp_hidden, 1, mlpp, 128)   # lane-dense head output

    return {
        "we0x": we0x, "we0m": we0m, "be0": be0,
        "we1": we1, "be1": be1,
        "we2": we2, "be2": be2,
        "wd0": wd0, "bd0": bd0,
        "wd1": wd1, "bd1": bd1,
        "wd2": wd2, "bd2": bd2,
        "wm0": wm0, "bm0": bm0,
        "wm1": wm1, "bm1": bm1,
    }


if __name__ == "__main__":
    # small shapes consistent with the module's forward; input_size is a
    # multiple of 128 and batch a multiple of the tile so the zero-copy
    # (no wrapper pad) bf16 input path and the 2-step parallel grid are used.
    batch = 16
    input_size = 128
    latent_dim = 8
    encoder_units = (64, 32)
    decoder_units = (32, 64)

    # mix of column types to exercise every per-column activation branch
    # (types are mutually exclusive per column, matching the PyTorch module)
    column_types = (["continuous"] * 32 + ["positive"] * 32 +
                    ["bool"] * 32 + ["categorical"] * 32)

    key = jax.random.PRNGKey(0)
    kx, kmask, kparam = jax.random.split(key, 3)
    x = jax.random.normal(kx, (batch, input_size), jnp.float32).astype(jnp.bfloat16)
    mask = (jax.random.uniform(kmask, (batch, input_size)) > 0.3).astype(jnp.bfloat16)

    params = init_params(kparam, input_size, latent_dim, encoder_units, decoder_units)

    constructed, p = dae_forward(x, mask, params, column_types)
    jax.block_until_ready((constructed, p))

    assert constructed.shape == (batch, input_size)
    assert p.shape == (batch, 1)
    assert bool(jnp.all(jnp.isfinite(constructed)))
    assert bool(jnp.all((p >= 0.0) & (p <= 1.0)))
    # positive columns are ReLU'd; width-1 softmax (categorical) columns are exactly 1
    assert bool(jnp.all(constructed[:, 32:64] >= 0.0))
    assert bool(jnp.all(constructed[:, 96:128] == 1.0))
    print("KERNEL_OK")
</pallas_src>

<mosaic_0001>
module attributes {stable_mosaic.version = 11 : i64} {
  func.func @_dae_kernel(%arg0: i32, %arg1: memref<8x128xbf16, #tpu.memory_space<vmem>>, %arg2: memref<8x128xbf16, #tpu.memory_space<vmem>>, %arg3: memref<128x128xbf16, #tpu.memory_space<vmem>>, %arg4: memref<128x128xbf16, #tpu.memory_space<vmem>>, %arg5: memref<1x128xf32, #tpu.memory_space<vmem>>, %arg6: memref<128x128xbf16, #tpu.memory_space<vmem>>, %arg7: memref<1x128xf32, #tpu.memory_space<vmem>>, %arg8: memref<128x128xbf16, #tpu.memory_space<vmem>>, %arg9: memref<1x128xf32, #tpu.memory_space<vmem>>, %arg10: memref<128x128xbf16, #tpu.memory_space<vmem>>, %arg11: memref<1x128xf32, #tpu.memory_space<vmem>>, %arg12: memref<128x128xbf16, #tpu.memory_space<vmem>>, %arg13: memref<1x128xf32, #tpu.memory_space<vmem>>, %arg14: memref<128x128xbf16, #tpu.memory_space<vmem>>, %arg15: memref<1x128xf32, #tpu.memory_space<vmem>>, %arg16: memref<128x128xbf16, #tpu.memory_space<vmem>>, %arg17: memref<1x128xf32, #tpu.memory_space<vmem>>, %arg18: memref<128x128xbf16, #tpu.memory_space<vmem>>, %arg19: memref<1x128xf32, #tpu.memory_space<vmem>>, %arg20: memref<3x128xf32, #tpu.memory_space<vmem>>, %arg21: memref<8x128xf32, #tpu.memory_space<vmem>>, %arg22: memref<8x128xbf16, #tpu.memory_space<vmem>>) attributes {dimension_semantics = [#tpu.dimension_semantics<parallel>], iteration_bounds = array<i64: 2>, scalar_prefetch = 0 : i64, scratch_operands = 0 : i64, tpu.core_type = #tpu.core_type<tc>, window_params = [{transform_indices = @transform_0, window_bounds = array<i64: 8, 128>}, {transform_indices = @transform_1, window_bounds = array<i64: 8, 128>}, {pipeline_mode = #tpu.pipeline_mode<synchronous>, transform_indices = @transform_2, window_bounds = array<i64: 128, 128>}, {pipeline_mode = #tpu.pipeline_mode<synchronous>, transform_indices = @transform_3, window_bounds = array<i64: 128, 128>}, {pipeline_mode = #tpu.pipeline_mode<synchronous>, transform_indices = @transform_4, window_bounds = array<i64: 1, 128>}, {pipeline_mode = #tpu.pipeline_mode<synchronous>, transform_indices = @transform_5, window_bounds = array<i64: 128, 128>}, {pipeline_mode = #tpu.pipeline_mode<synchronous>, transform_indices = @transform_6, window_bounds = array<i64: 1, 128>}, {pipeline_mode = #tpu.pipeline_mode<synchronous>, transform_indices = @transform_7, window_bounds = array<i64: 128, 128>}, {pipeline_mode = #tpu.pipeline_mode<synchronous>, transform_indices = @transform_8, window_bounds = array<i64: 1, 128>}, {pipeline_mode = #tpu.pipeline_mode<synchronous>, transform_indices = @transform_9, window_bounds = array<i64: 128, 128>}, {pipeline_mode = #tpu.pipeline_mode<synchronous>, transform_indices = @transform_10, window_bounds = array<i64: 1, 128>}, {pipeline_mode = #tpu.pipeline_mode<synchronous>, transform_indices = @transform_11, window_bounds = array<i64: 128, 128>}, {pipeline_mode = #tpu.pipeline_mode<synchronous>, transform_indices = @transform_12, window_bounds = array<i64: 1, 128>}, {pipeline_mode = #tpu.pipeline_mode<synchronous>, transform_indices = @transform_13, window_bounds = array<i64: 128, 128>}, {pipeline_mode = #tpu.pipeline_mode<synchronous>, transform_indices = @transform_14, window_bounds = array<i64: 1, 128>}, {pipeline_mode = #tpu.pipeline_mode<synchronous>, transform_indices = @transform_15, window_bounds = array<i64: 128, 128>}, {pipeline_mode = #tpu.pipeline_mode<synchronous>, transform_indices = @transform_16, window_bounds = array<i64: 1, 128>}, {pipeline_mode = #tpu.pipeline_mode<synchronous>, transform_indices = @transform_17, window_bounds = array<i64: 128, 128>}, {pipeline_mode = #tpu.pipeline_mode<synchronous>, transform_indices = @transform_18, window_bounds = array<i64: 1, 128>}, {pipeline_mode = #tpu.pipeline_mode<synchronous>, transform_indices = @transform_19, window_bounds = array<i64: 3, 128>}, {transform_indices = @transform_20, window_bounds = array<i64: 8, 128>}, {transform_indices = @transform_21, window_bounds = array<i64: 8, 128>}]} {
    %c0 = arith.constant 0 : index
    %c0_0 = arith.constant 0 : index
    %0 = vector.load %arg2[%c0, %c0_0] : memref<8x128xbf16, #tpu.memory_space<vmem>>, vector<8x128xbf16>
    %1 = arith.extf %0 : vector<8x128xbf16> to vector<8x128xf32>
    %c0_1 = arith.constant 0 : index
    %c0_2 = arith.constant 0 : index
    %2 = vector.load %arg1[%c0_1, %c0_2] : memref<8x128xbf16, #tpu.memory_space<vmem>>, vector<8x128xbf16>
    %3 = arith.extf %2 : vector<8x128xbf16> to vector<8x128xf32>
    %4 = arith.mulf %3, %1 : vector<8x128xf32>
    %5 = arith.truncf %4 : vector<8x128xf32> to vector<8x128xbf16>
    %6 = arith.truncf %1 : vector<8x128xf32> to vector<8x128xbf16>
    %c0_3 = arith.constant 0 : index
    %c0_4 = arith.constant 0 : index
    %7 = vector.load %arg3[%c0_3, %c0_4] : memref<128x128xbf16, #tpu.memory_space<vmem>>, vector<128x128xbf16>
    %cst = arith.constant dense<0.000000e+00> : vector<8x128xf32>
    %8 = tpu.matmul %5, %7, %cst {dimension_numbers = #tpu.dot_dimension_numbers<[1], [0], [0], [1], [0, 0, 1, 1], [], []>} : vector<8x128xbf16>, vector<128x128xbf16>, vector<8x128xf32> -> vector<8x128xf32>
    %c0_5 = arith.constant 0 : index
    %c0_6 = arith.constant 0 : index
    %9 = vector.load %arg4[%c0_5, %c0_6] : memref<128x128xbf16, #tpu.memory_space<vmem>>, vector<128x128xbf16>
    %cst_7 = arith.constant dense<0.000000e+00> : vector<8x128xf32>
    %10 = tpu.matmul %6, %9, %cst_7 {dimension_numbers = #tpu.dot_dimension_numbers<[1], [0], [0], [1], [0, 0, 1, 1], [], []>} : vector<8x128xbf16>, vector<128x128xbf16>, vector<8x128xf32> -> vector<8x128xf32>
    %11 = arith.addf %8, %10 : vector<8x128xf32>
    %c0_8 = arith.constant 0 : index
    %c0_9 = arith.constant 0 : index
    %12 = vector.load %arg5[%c0_8, %c0_9] : memref<1x128xf32, #tpu.memory_space<vmem>>, vector<1x128xf32>
    %13 = vector.broadcast %12 : vector<1x128xf32> to vector<8x128xf32>
    %14 = arith.addf %11, %13 : vector<8x128xf32>
    %cst_10 = arith.constant 0.000000e+00 : f32
    %15 = vector.broadcast %cst_10 : f32 to vector<8x128xf32>
    %16 = arith.maximumf %14, %15 : vector<8x128xf32>
    %17 = arith.truncf %16 : vector<8x128xf32> to vector<8x128xbf16>
    %c0_11 = arith.constant 0 : index
    %c0_12 = arith.constant 0 : index
    %18 = vector.load %arg6[%c0_11, %c0_12] : memref<128x128xbf16, #tpu.memory_space<vmem>>, vector<128x128xbf16>
    %cst_13 = arith.constant dense<0.000000e+00> : vector<8x128xf32>
    %19 = tpu.matmul %17, %18, %cst_13 {dimension_numbers = #tpu.dot_dimension_numbers<[1], [0], [0], [1], [0, 0, 1, 1], [], []>} : vector<8x128xbf16>, vector<128x128xbf16>, vector<8x128xf32> -> vector<8x128xf32>
    %c0_14 = arith.constant 0 : index
    %c0_15 = arith.constant 0 : index
    %20 = vector.load %arg7[%c0_14, %c0_15] : memref<1x128xf32, #tpu.memory_space<vmem>>, vector<1x128xf32>
    %21 = vector.broadcast %20 : vector<1x128xf32> to vector<8x128xf32>
    %22 = arith.addf %19, %21 : vector<8x128xf32>
    %cst_16 = arith.constant 0.000000e+00 : f32
    %23 = vector.broadcast %cst_16 : f32 to vector<8x128xf32>
    %24 = arith.maximumf %22, %23 : vector<8x128xf32>
    %25 = arith.truncf %24 : vector<8x128xf32> to vector<8x128xbf16>
    %c0_17 = arith.constant 0 : index
    %c0_18 = arith.constant 0 : index
    %26 = vector.load %arg8[%c0_17, %c0_18] : memref<128x128xbf16, #tpu.memory_space<vmem>>, vector<128x128xbf16>
    %cst_19 = arith.constant dense<0.000000e+00> : vector<8x128xf32>
    %27 = tpu.matmul %25, %26, %cst_19 {dimension_numbers = #tpu.dot_dimension_numbers<[1], [0], [0], [1], [0, 0, 1, 1], [], []>} : vector<8x128xbf16>, vector<128x128xbf16>, vector<8x128xf32> -> vector<8x128xf32>
    %c0_20 = arith.constant 0 : index
    %c0_21 = arith.constant 0 : index
    %28 = vector.load %arg9[%c0_20, %c0_21] : memref<1x128xf32, #tpu.memory_space<vmem>>, vector<1x128xf32>
    %29 = vector.broadcast %28 : vector<1x128xf32> to vector<8x128xf32>
    %30 = arith.addf %27, %29 : vector<8x128xf32>
    %cst_22 = arith.constant 0.000000e+00 : f32
    %31 = vector.broadcast %cst_22 : f32 to vector<8x128xf32>
    %32 = arith.maximumf %30, %31 : vector<8x128xf32>
    %33 = arith.truncf %32 : vector<8x128xf32> to vector<8x128xbf16>
    %c0_23 = arith.constant 0 : index
    %c0_24 = arith.constant 0 : index
    %34 = vector.load %arg10[%c0_23, %c0_24] : memref<128x128xbf16, #tpu.memory_space<vmem>>, vector<128x128xbf16>
    %cst_25 = arith.constant dense<0.000000e+00> : vector<8x128xf32>
    %35 = tpu.matmul %33, %34, %cst_25 {dimension_numbers = #tpu.dot_dimension_numbers<[1], [0], [0], [1], [0, 0, 1, 1], [], []>} : vector<8x128xbf16>, vector<128x128xbf16>, vector<8x128xf32> -> vector<8x128xf32>
    %c0_26 = arith.constant 0 : index
    %c0_27 = arith.constant 0 : index
    %36 = vector.load %arg11[%c0_26, %c0_27] : memref<1x128xf32, #tpu.memory_space<vmem>>, vector<1x128xf32>
    %37 = vector.broadcast %36 : vector<1x128xf32> to vector<8x128xf32>
    %38 = arith.addf %35, %37 : vector<8x128xf32>
    %cst_28 = arith.constant 0.000000e+00 : f32
    %39 = vector.broadcast %cst_28 : f32 to vector<8x128xf32>
    %40 = arith.maximumf %38, %39 : vector<8x128xf32>
    %41 = arith.truncf %40 : vector<8x128xf32> to vector<8x128xbf16>
    %c0_29 = arith.constant 0 : index
    %c0_30 = arith.constant 0 : index
    %42 = vector.load %arg12[%c0_29, %c0_30] : memref<128x128xbf16, #tpu.memory_space<vmem>>, vector<128x128xbf16>
    %cst_31 = arith.constant dense<0.000000e+00> : vector<8x128xf32>
    %43 = tpu.matmul %41, %42, %cst_31 {dimension_numbers = #tpu.dot_dimension_numbers<[1], [0], [0], [1], [0, 0, 1, 1], [], []>} : vector<8x128xbf16>, vector<128x128xbf16>, vector<8x128xf32> -> vector<8x128xf32>
    %c0_32 = arith.constant 0 : index
    %c0_33 = arith.constant 0 : index
    %44 = vector.load %arg13[%c0_32, %c0_33] : memref<1x128xf32, #tpu.memory_space<vmem>>, vector<1x128xf32>
    %45 = vector.broadcast %44 : vector<1x128xf32> to vector<8x128xf32>
    %46 = arith.addf %43, %45 : vector<8x128xf32>
    %cst_34 = arith.constant 0.000000e+00 : f32
    %47 = vector.broadcast %cst_34 : f32 to vector<8x128xf32>
    %48 = arith.maximumf %46, %47 : vector<8x128xf32>
    %49 = arith.truncf %48 : vector<8x128xf32> to vector<8x128xbf16>
    %c0_35 = arith.constant 0 : index
    %c0_36 = arith.constant 0 : index
    %50 = vector.load %arg14[%c0_35, %c0_36] : memref<128x128xbf16, #tpu.memory_space<vmem>>, vector<128x128xbf16>
    %cst_37 = arith.constant dense<0.000000e+00> : vector<8x128xf32>
    %51 = tpu.matmul %49, %50, %cst_37 {dimension_numbers = #tpu.dot_dimension_numbers<[1], [0], [0], [1], [0, 0, 1, 1], [], []>} : vector<8x128xbf16>, vector<128x128xbf16>, vector<8x128xf32> -> vector<8x128xf32>
    %c0_38 = arith.constant 0 : index
    %c0_39 = arith.constant 0 : index
    %52 = vector.load %arg15[%c0_38, %c0_39] : memref<1x128xf32, #tpu.memory_space<vmem>>, vector<1x128xf32>
    %53 = vector.broadcast %52 : vector<1x128xf32> to vector<8x128xf32>
    %54 = arith.addf %51, %53 : vector<8x128xf32>
    %c0_40 = arith.constant 0 : index
    %c0_41 = arith.constant 0 : index
    %55 = vector.load %arg20[%c0_40, %c0_41] : memref<3x128xf32, #tpu.memory_space<vmem>>, vector<3x128xf32>
    %56 = vector.extract_strided_slice %55 {offsets = [0, 0], sizes = [1, 128], strides = [1, 1]} : vector<3x128xf32> to vector<1x128xf32>
    %57 = vector.extract_strided_slice %55 {offsets = [1, 0], sizes = [1, 128], strides = [1, 1]} : vector<3x128xf32> to vector<1x128xf32>
    %58 = vector.extract_strided_slice %55 {offsets = [2, 0], sizes = [1, 128], strides = [1, 1]} : vector<3x128xf32> to vector<1x128xf32>
    %cst_42 = arith.constant 0.000000e+00 : f32
    %59 = vector.broadcast %cst_42 : f32 to vector<8x128xf32>
    %60 = arith.maximumf %54, %59 : vector<8x128xf32>
    %cst_43 = arith.constant 0.000000e+00 : f32
    %61 = vector.broadcast %cst_43 : f32 to vector<1x128xf32>
    %62 = arith.cmpf ogt, %56, %61 : vector<1x128xf32>
    %63 = vector.shape_cast %62 : vector<1x128xi1> to vector<1x128xi1>
    %64 = vector.broadcast %63 : vector<1x128xi1> to vector<8x128xi1>
    %65 = arith.select %64, %60, %54 : vector<8x128xi1>, vector<8x128xf32>
    %cst_44 = arith.constant 0.000000e+00 : f32
    %66 = vector.broadcast %cst_44 : f32 to vector<1x128xf32>
    %67 = arith.cmpf ogt, %57, %66 : vector<1x128xf32>
    %68 = arith.negf %54 : vector<8x128xf32>
    %69 = math.exp %68 : vector<8x128xf32>
    %cst_45 = arith.constant 1.000000e+00 : f32
    %70 = vector.broadcast %cst_45 : f32 to vector<8x128xf32>
    %71 = arith.addf %70, %69 : vector<8x128xf32>
    %72 = arith.divf %70, %71 : vector<8x128xf32>
    %73 = vector.shape_cast %67 : vector<1x128xi1> to vector<1x128xi1>
    %74 = vector.broadcast %73 : vector<1x128xi1> to vector<8x128xi1>
    %75 = arith.select %74, %72, %65 : vector<8x128xi1>, vector<8x128xf32>
    %cst_46 = arith.constant 0.000000e+00 : f32
    %76 = vector.broadcast %cst_46 : f32 to vector<1x128xf32>
    %77 = arith.cmpf ogt, %58, %76 : vector<1x128xf32>
    %cst_47 = arith.constant 1.000000e+00 : f32
    %78 = vector.shape_cast %77 : vector<1x128xi1> to vector<1x128xi1>
    %79 = vector.broadcast %78 : vector<1x128xi1> to vector<8x128xi1>
    %80 = vector.broadcast %cst_47 : f32 to vector<8x128xf32>
    %81 = arith.select %79, %80, %75 : vector<8x128xi1>, vector<8x128xf32>
    %c0_48 = arith.constant 0 : index
    %c0_49 = arith.constant 0 : index
    %82 = vector.load %arg21[%c0_48, %c0_49] : memref<8x128xf32, #tpu.memory_space<vmem>>, vector<8x128xf32>
    tpu.vector_store %arg21[%c0_48, %c0_49], %81 {strides = array<i32>} : memref<8x128xf32, #tpu.memory_space<vmem>>, vector<8x128xf32>,
    %c0_50 = arith.constant 0 : index
    %c0_51 = arith.constant 0 : index
    %83 = vector.load %arg16[%c0_50, %c0_51] : memref<128x128xbf16, #tpu.memory_space<vmem>>, vector<128x128xbf16>
    %cst_52 = arith.constant dense<0.000000e+00> : vector<8x128xf32>
    %84 = tpu.matmul %33, %83, %cst_52 {dimension_numbers = #tpu.dot_dimension_numbers<[1], [0], [0], [1], [0, 0, 1, 1], [], []>} : vector<8x128xbf16>, vector<128x128xbf16>, vector<8x128xf32> -> vector<8x128xf32>
    %c0_53 = arith.constant 0 : index
    %c0_54 = arith.constant 0 : index
    %85 = vector.load %arg17[%c0_53, %c0_54] : memref<1x128xf32, #tpu.memory_space<vmem>>, vector<1x128xf32>
    %86 = vector.broadcast %85 : vector<1x128xf32> to vector<8x128xf32>
    %87 = arith.addf %84, %86 : vector<8x128xf32>
    %cst_55 = arith.constant 0.000000e+00 : f32
    %88 = vector.broadcast %cst_55 : f32 to vector<8x128xf32>
    %89 = arith.maximumf %87, %88 : vector<8x128xf32>
    %90 = arith.truncf %89 : vector<8x128xf32> to vector<8x128xbf16>
    %c0_56 = arith.constant 0 : index
    %c0_57 = arith.constant 0 : index
    %91 = vector.load %arg18[%c0_56, %c0_57] : memref<128x128xbf16, #tpu.memory_space<vmem>>, vector<128x128xbf16>
    %cst_58 = arith.constant dense<0.000000e+00> : vector<8x128xf32>
    %92 = tpu.matmul %90, %91, %cst_58 {dimension_numbers = #tpu.dot_dimension_numbers<[1], [0], [0], [1], [0, 0, 1, 1], [], []>} : vector<8x128xbf16>, vector<128x128xbf16>, vector<8x128xf32> -> vector<8x128xf32>
    %c0_59 = arith.constant 0 : index
    %c0_60 = arith.constant 0 : index
    %93 = vector.load %arg19[%c0_59, %c0_60] : memref<1x128xf32, #tpu.memory_space<vmem>>, vector<1x128xf32>
    %94 = vector.broadcast %93 : vector<1x128xf32> to vector<8x128xf32>
    %95 = arith.addf %92, %94 : vector<8x128xf32>
    %96 = arith.negf %95 : vector<8x128xf32>
    %97 = math.exp %96 : vector<8x128xf32>
    %cst_61 = arith.constant 1.000000e+00 : f32
    %98 = vector.broadcast %cst_61 : f32 to vector<8x128xf32>
    %99 = arith.addf %98, %97 : vector<8x128xf32>
    %100 = arith.divf %98, %99 : vector<8x128xf32>
    %101 = arith.truncf %100 : vector<8x128xf32> to vector<8x128xbf16>
    %c0_62 = arith.constant 0 : index
    %c0_63 = arith.constant 0 : index
    %102 = vector.load %arg22[%c0_62, %c0_63] : memref<8x128xbf16, #tpu.memory_space<vmem>>, vector<8x128xbf16>
    tpu.vector_store %arg22[%c0_62, %c0_63], %101 {strides = array<i32>} : memref<8x128xbf16, #tpu.memory_space<vmem>>, vector<8x128xbf16>,
    return
  }
  func.func @transform_0(%arg0: i32) -> (i32, i32) {
    %c0_i32 = arith.constant 0 : i32
    %c0_i32_0 = arith.constant 0 : i32
    return %arg0, %c0_i32 : i32, i32
  }
  func.func @transform_1(%arg0: i32) -> (i32, i32) {
    %c0_i32 = arith.constant 0 : i32
    %c0_i32_0 = arith.constant 0 : i32
    return %arg0, %c0_i32 : i32, i32
  }
  func.func @transform_2(%arg0: i32) -> (i32, i32) {
    %c0_i32 = arith.constant 0 : i32
    %c0_i32_0 = arith.constant 0 : i32
    %c0_i32_1 = arith.constant 0 : i32
    return %c0_i32, %c0_i32_0 : i32, i32
  }
  func.func @transform_3(%arg0: i32) -> (i32, i32) {
    %c0_i32 = arith.constant 0 : i32
    %c0_i32_0 = arith.constant 0 : i32
    %c0_i32_1 = arith.constant 0 : i32
    return %c0_i32, %c0_i32_0 : i32, i32
  }
  func.func @transform_4(%arg0: i32) -> (i32, i32) {
    %c0_i32 = arith.constant 0 : i32
    %c0_i32_0 = arith.constant 0 : i32
    %c0_i32_1 = arith.constant 0 : i32
    return %c0_i32, %c0_i32_0 : i32, i32
  }
  func.func @transform_5(%arg0: i32) -> (i32, i32) {
    %c0_i32 = arith.constant 0 : i32
    %c0_i32_0 = arith.constant 0 : i32
    %c0_i32_1 = arith.constant 0 : i32
    return %c0_i32, %c0_i32_0 : i32, i32
  }
  func.func @transform_6(%arg0: i32) -> (i32, i32) {
    %c0_i32 = arith.constant 0 : i32
    %c0_i32_0 = arith.constant 0 : i32
    %c0_i32_1 = arith.constant 0 : i32
    return %c0_i32, %c0_i32_0 : i32, i32
  }
  func.func @transform_7(%arg0: i32) -> (i32, i32) {
    %c0_i32 = arith.constant 0 : i32
    %c0_i32_0 = arith.constant 0 : i32
    %c0_i32_1 = arith.constant 0 : i32
    return %c0_i32, %c0_i32_0 : i32, i32
  }
  func.func @transform_8(%arg0: i32) -> (i32, i32) {
    %c0_i32 = arith.constant 0 : i32
    %c0_i32_0 = arith.constant 0 : i32
    %c0_i32_1 = arith.constant 0 : i32
    return %c0_i32, %c0_i32_0 : i32, i32
  }
  func.func @transform_9(%arg0: i32) -> (i32, i32) {
    %c0_i32 = arith.constant 0 : i32
    %c0_i32_0 = arith.constant 0 : i32
    %c0_i32_1 = arith.constant 0 : i32
    return %c0_i32, %c0_i32_0 : i32, i32
  }
  func.func @transform_10(%arg0: i32) -> (i32, i32) {
    %c0_i32 = arith.constant 0 : i32
    %c0_i32_0 = arith.constant 0 : i32
    %c0_i32_1 = arith.constant 0 : i32
    return %c0_i32, %c0_i32_0 : i32, i32
  }
  func.func @transform_11(%arg0: i32) -> (i32, i32) {
    %c0_i32 = arith.constant 0 : i32
    %c0_i32_0 = arith.constant 0 : i32
    %c0_i32_1 = arith.constant 0 : i32
    return %c0_i32, %c0_i32_0 : i32, i32
  }
  func.func @transform_12(%arg0: i32) -> (i32, i32) {
    %c0_i32 = arith.constant 0 : i32
    %c0_i32_0 = arith.constant 0 : i32
    %c0_i32_1 = arith.constant 0 : i32
    return %c0_i32, %c0_i32_0 : i32, i32
  }
  func.func @transform_13(%arg0: i32) -> (i32, i32) {
    %c0_i32 = arith.constant 0 : i32
    %c0_i32_0 = arith.constant 0 : i32
    %c0_i32_1 = arith.constant 0 : i32
    return %c0_i32, %c0_i32_0 : i32, i32
  }
  func.func @transform_14(%arg0: i32) -> (i32, i32) {
    %c0_i32 = arith.constant 0 : i32
    %c0_i32_0 = arith.constant 0 : i32
    %c0_i32_1 = arith.constant 0 : i32
    return %c0_i32, %c0_i32_0 : i32, i32
  }
  func.func @transform_15(%arg0: i32) -> (i32, i32) {
    %c0_i32 = arith.constant 0 : i32
    %c0_i32_0 = arith.constant 0 : i32
    %c0_i32_1 = arith.constant 0 : i32
    return %c0_i32, %c0_i32_0 : i32, i32
  }
  func.func @transform_16(%arg0: i32) -> (i32, i32) {
    %c0_i32 = arith.constant 0 : i32
    %c0_i32_0 = arith.constant 0 : i32
    %c0_i32_1 = arith.constant 0 : i32
    return %c0_i32, %c0_i32_0 : i32, i32
  }
  func.func @transform_17(%arg0: i32) -> (i32, i32) {
    %c0_i32 = arith.constant 0 : i32
    %c0_i32_0 = arith.constant 0 : i32
    %c0_i32_1 = arith.constant 0 : i32
    return %c0_i32, %c0_i32_0 : i32, i32
  }
  func.func @transform_18(%arg0: i32) -> (i32, i32) {
    %c0_i32 = arith.constant 0 : i32
    %c0_i32_0 = arith.constant 0 : i32
    %c0_i32_1 = arith.constant 0 : i32
    return %c0_i32, %c0_i32_0 : i32, i32
  }
  func.func @transform_19(%arg0: i32) -> (i32, i32) {
    %c0_i32 = arith.constant 0 : i32
    %c0_i32_0 = arith.constant 0 : i32
    %c0_i32_1 = arith.constant 0 : i32
    return %c0_i32, %c0_i32_0 : i32, i32
  }
  func.func @transform_20(%arg0: i32) -> (i32, i32) {
    %c0_i32 = arith.constant 0 : i32
    %c0_i32_0 = arith.constant 0 : i32
    return %arg0, %c0_i32 : i32, i32
  }
  func.func @transform_21(%arg0: i32) -> (i32, i32) {
    %c0_i32 = arith.constant 0 : i32
    %c0_i32_0 = arith.constant 0 : i32
    return %arg0, %c0_i32 : i32, i32
  }
}

</mosaic_0001>

<llo_original>
// kernel: tpu_custom_call.1
$region0: #{tpu_custom_call.1}
  #allocation0 [shape = 'u32[]', space=smem, size = 0x4, offset = 0x4, fixed_abs, tag = 'smem constant byte address 0x4 - core index']
  #allocation1 [shape = 'u32[144,128]{1,0:T(1,128)}', space=vmem, size = 0x12000, scoped, tag = 'internal scratch']
  %s0 = inlined_call_operand.hbm [shape: bf16[16,128], index: 0, kind: input, shape index: {}]
  %s1 = inlined_call_operand.hbm [shape: bf16[16,128], index: 1, kind: input, shape index: {}]
  %s2 = inlined_call_operand.hbm [shape: bf16[128,128], index: 2, kind: input, shape index: {}]
  %s3 = inlined_call_operand.hbm [shape: bf16[128,128], index: 3, kind: input, shape index: {}]
  %s4 = inlined_call_operand.vmem [shape: f32[1,128], index: 4, kind: input, shape index: {}]
  %s5 = inlined_call_operand.hbm [shape: bf16[128,128], index: 5, kind: input, shape index: {}]
  %s6 = inlined_call_operand.vmem [shape: f32[1,128], index: 6, kind: input, shape index: {}]
  %s7 = inlined_call_operand.hbm [shape: bf16[128,128], index: 7, kind: input, shape index: {}]
  %s8 = inlined_call_operand.vmem [shape: f32[1,128], index: 8, kind: input, shape index: {}]
  %s9 = inlined_call_operand.hbm [shape: bf16[128,128], index: 9, kind: input, shape index: {}]
  %s10 = inlined_call_operand.vmem [shape: f32[1,128], index: 10, kind: input, shape index: {}]
  %s11 = inlined_call_operand.hbm [shape: bf16[128,128], index: 11, kind: input, shape index: {}]
  %s12 = inlined_call_operand.vmem [shape: f32[1,128], index: 12, kind: input, shape index: {}]
  %s13 = inlined_call_operand.hbm [shape: bf16[128,128], index: 13, kind: input, shape index: {}]
  %s14 = inlined_call_operand.vmem [shape: f32[1,128], index: 14, kind: input, shape index: {}]
  %s15 = inlined_call_operand.hbm [shape: bf16[128,128], index: 15, kind: input, shape index: {}]
  %s16 = inlined_call_operand.vmem [shape: f32[1,128], index: 16, kind: input, shape index: {}]
  %s17 = inlined_call_operand.hbm [shape: bf16[128,128], index: 17, kind: input, shape index: {}]
  %s18 = inlined_call_operand.vmem [shape: f32[1,128], index: 18, kind: input, shape index: {}]
  %s19 = inlined_call_operand.vmem [shape: f32[3,128], index: 19, kind: input, shape index: {}]
  %s20 = inlined_call_operand.hbm [shape: f32[16,128], index: 20, kind: output, shape index: {0}]
  %s21 = inlined_call_operand.hbm [shape: bf16[16,128], index: 21, kind: output, shape index: {1}]
  %22 = xla_tuple %s20, %s21
  %s23 = sld [smem:[#allocation0]]
  $region165: #{tpu_custom_call.1} parent=0
    _
  %s25 = ssub.s32 1, %s23
  %s26 = scalar_select 0, %s25, %s23
  $region1: #{tpu_custom_call.1} parent=0
    #allocation2 [shape = 'u8[4096]{0}', space=vmem, size = 0x1000, scoped, tag = 'input window, operand 0']
    #allocation3 [shape = 's32[2]{0}', space=sflag, size = 0x8, scoped, tag = 'scoped memory for tpu_custom_call.1']
    #allocation4 [shape = 's32[2]{0}', space=sflag, size = 0x8, scoped, tag = 'scoped memory for tpu_custom_call.1']
    #allocation5 [shape = 'u8[4096]{0}', space=vmem, size = 0x1000, scoped, tag = 'input window, operand 1']
    #allocation6 [shape = 's32[2]{0}', space=sflag, size = 0x8, scoped, tag = 'scoped memory for tpu_custom_call.1']
    #allocation7 [shape = 'u8[32768]{0}', space=vmem, size = 0x8000, scoped, tag = 'input window, operand 2, single buffered']
    #allocation8 [shape = 'u8[32768]{0}', space=vmem, size = 0x8000, scoped, tag = 'input window, operand 3, single buffered']
    #allocation9 [shape = 's32[1]{0}', space=sflag, size = 0x4, scoped, tag = 'scoped memory for tpu_custom_call.1']
    #allocation10 [shape = 'u8[32768]{0}', space=vmem, size = 0x8000, scoped, tag = 'input window, operand 5, single buffered']
    #allocation11 [shape = 'u8[32768]{0}', space=vmem, size = 0x8000, scoped, tag = 'input window, operand 7, single buffered']
    #allocation12 [shape = 's32[1]{0}', space=sflag, size = 0x4, scoped, tag = 'scoped memory for tpu_custom_call.1']
    #allocation13 [shape = 'u8[32768]{0}', space=vmem, size = 0x8000, scoped, tag = 'input window, operand 9, single buffered']
    #allocation14 [shape = 'u8[32768]{0}', space=vmem, size = 0x8000, scoped, tag = 'input window, operand 11, single buffered']
    #allocation15 [shape = 's32[1]{0}', space=sflag, size = 0x4, scoped, tag = 'scoped memory for tpu_custom_call.1']
    #allocation16 [shape = 'u8[32768]{0}', space=vmem, size = 0x8000, scoped, tag = 'input window, operand 13, single buffered']
    #allocation17 [shape = 'u8[32768]{0}', space=vmem, size = 0x8000, scoped, tag = 'input window, operand 15, single buffered']
    #allocation18 [shape = 's32[1]{0}', space=sflag, size = 0x4, scoped, tag = 'scoped memory for tpu_custom_call.1']
    #allocation19 [shape = 'u8[32768]{0}', space=vmem, size = 0x8000, scoped, tag = 'input window, operand 17, single buffered']
    #allocation20 [shape = 'u8[8192]{0}', space=vmem, size = 0x2000, scoped, tag = 'output window, operand 0']
    #allocation21 [shape = 'u8[4096]{0}', space=vmem, size = 0x1000, scoped, tag = 'output window, operand 1']
    #allocation22 [shape = 's32[2]{0}', space=sflag, size = 0x8, scoped, tag = 'scoped memory for tpu_custom_call.1']
    %27 = vsyncpa [#allocation3], 0
    %s28 = scalar_lea.sflag [#allocation3], 1
    %29 = vsyncpa %s28, 0
    %30 = vsyncpa [#allocation6], 0
    %s31 = scalar_lea.sflag [#allocation6], 1
    %32 = vsyncpa %s31, 0
    %33 = vsyncpa [#allocation9], 0
    %34 = vsyncpa [#allocation12], 0
    %35 = vsyncpa [#allocation15], 0
    %36 = vsyncpa [#allocation18], 0
    %37 = vsyncpa [#allocation4], 0
    %s38 = scalar_lea.sflag [#allocation4], 1
    %39 = vsyncpa %s38, 0
    %40 = vsyncpa [#allocation22], 0
    %s41 = scalar_lea.sflag [#allocation22], 1
    %42 = vsyncpa %s41, 0
    loop: start=0, step=1, limit=4
    $region2: #{tpu_custom_call.1} parent=1 // loop_pre_header
      _
    $region3: #{tpu_custom_call.1} parent=1 // loop_header
      %s44 = sphi 0, %s48
      %p45 = scmp.ge.s32.totalorder %s44, 4
      %s54 = sphi 0, %s56
      %s57 = sphi 0, %s54
      %s58 = sphi 0, %s57
      %s74 = sphi 0, %s58
      %s80 = sphi 0, %s82
      %s83 = sphi 0, %s80
      %s84 = sphi 0, %s83
      %s100 = sphi 0, %s84
      %s104 = sphi 0, %s104
      %s106 = sphi 0, %s104
      %s107 = sphi 0, %s106
      %s121 = sphi 0, %s107
      %s125 = sphi 0, %s125
      %s127 = sphi 0, %s125
      %s128 = sphi 0, %s127
      %s142 = sphi 0, %s128
      %s146 = sphi 0, %s146
      %s148 = sphi 0, %s146
      %s149 = sphi 0, %s148
      %s163 = sphi 0, %s149
      %s167 = sphi 0, %s167
      %s169 = sphi 0, %s167
      %s170 = sphi 0, %s169
      %s184 = sphi 0, %s170
      %s188 = sphi 0, %s188
      %s190 = sphi 0, %s188
      %s191 = sphi 0, %s190
      %s205 = sphi 0, %s191
      %s209 = sphi 0, %s209
      %s211 = sphi 0, %s209
      %s212 = sphi 0, %s211
      %s226 = sphi 0, %s212
      %s230 = sphi 0, %s230
      %s232 = sphi 0, %s230
      %s233 = sphi 0, %s232
      %s247 = sphi 0, %s233
      %s251 = sphi 0, %s251
      %s253 = sphi 0, %s251
      %s254 = sphi 0, %s253
      %s268 = sphi 0, %s254
      %s272 = sphi 0, %s272
      %s274 = sphi 0, %s272
      %s275 = sphi 0, %s274
      %s289 = sphi 0, %s275
      %s293 = sphi 0, %s293
      %s295 = sphi 0, %s293
      %s296 = sphi 0, %s295
      %s310 = sphi 0, %s296
      %s314 = sphi 0, %s314
      %s316 = sphi 0, %s314
      %s317 = sphi 0, %s316
      %s331 = sphi 0, %s317
      %s335 = sphi 0, %s335
      %s337 = sphi 0, %s335
      %s338 = sphi 0, %s337
      %s352 = sphi 0, %s338
      %s356 = sphi 0, %s356
      %s358 = sphi 0, %s356
      %s359 = sphi 0, %s358
      %s373 = sphi 0, %s359
      %s377 = sphi 0, %s377
      %s379 = sphi 0, %s377
      %s380 = sphi 0, %s379
      %s394 = sphi 0, %s380
      %s398 = sphi 0, %s398
      %s400 = sphi 0, %s398
      %s401 = sphi 0, %s400
      %s415 = sphi 0, %s401
      %s419 = sphi 0, %s419
      %s421 = sphi 0, %s419
      %s422 = sphi 0, %s421
      %s436 = sphi 0, %s422
      %s440 = sphi 0, %s440
      %s442 = sphi 0, %s440
      %s443 = sphi 0, %s442
      %s457 = sphi 0, %s443
      %s461 = sphi 0, %s461
      %s463 = sphi 0, %s461
      %s464 = sphi 0, %s463
      %s478 = sphi 0, %s464
      %s484 = sphi 0, %s486
      %s487 = sphi 0, %s484
      %s488 = sphi 0, %s487
      %s504 = sphi 0, %s488
      %s510 = sphi 0, %s512
      %s513 = sphi 0, %s510
      %s514 = sphi 0, %s513
      %s530 = sphi 0, %s514
    $region4: #{tpu_custom_call.1} parent=1 // loop_header_branch
      %47 = sbr.rel (%p45) target = $region8
    $region5: #{tpu_custom_call.1} parent=1 // loop_body
      %s49 = ssub.s32 %s44, 1
      %s50 = ssub.s32 %s44, 2
      %s51 = sadd.s32 %s44, 1
      %s52 = ssub.s32 %s44, %s51
      %p53 = scmp.eq.s32.totalorder %s52, 0
      %s55 = sadd.s32 %s54, 1
      %s56 = scalar_select %p53, %s54, %s55
      %p59 = pneg %p53
      %p60 = scmp.eq.s32.totalorder %s44, 1
      %p61 = por %p59, %p60
      %p62 = scmp.ne.s32.totalorder %s54, %s57
      %p63 = scmp.eq.s32.totalorder %s44, 0
      %p64 = por %p62, %p63
      %p65 = scmp.ne.s32.totalorder %s54, %s57
      %p66 = scmp.eq.s32.totalorder %s49, 1
      %p67 = por %p65, %p66
      %p68 = scmp.ne.s32.totalorder %s57, %s58
      %p69 = scmp.eq.s32.totalorder %s49, 0
      %p70 = por %p68, %p69
      %p71 = scmp.ne.s32.totalorder %s57, %s58
      %p72 = scmp.eq.s32.totalorder %s50, 1
      %p73 = por %p71, %p72
      %p75 = scmp.ne.s32.totalorder %s58, %s74
      %p76 = scmp.eq.s32.totalorder %s50, 0
      %p77 = por %p75, %p76
      %s78 = ssub.s32 %s44, %s51
      %p79 = scmp.eq.s32.totalorder %s78, 0
      %s81 = sadd.s32 %s80, 1
      %s82 = scalar_select %p79, %s80, %s81
      %p85 = pneg %p79
      %p86 = scmp.eq.s32.totalorder %s44, 1
      %p87 = por %p85, %p86
      %p88 = scmp.ne.s32.totalorder %s80, %s83
      %p89 = scmp.eq.s32.totalorder %s44, 0
      %p90 = por %p88, %p89
      %p91 = scmp.ne.s32.totalorder %s80, %s83
      %p92 = scmp.eq.s32.totalorder %s49, 1
      %p93 = por %p91, %p92
      %p94 = scmp.ne.s32.totalorder %s83, %s84
      %p95 = scmp.eq.s32.totalorder %s49, 0
      %p96 = por %p94, %p95
      %p97 = scmp.ne.s32.totalorder %s83, %s84
      %p98 = scmp.eq.s32.totalorder %s50, 1
      %p99 = por %p97, %p98
      %p101 = scmp.ne.s32.totalorder %s84, %s100
      %p102 = scmp.eq.s32.totalorder %s50, 0
      %p103 = por %p101, %p102
      %s105 = sadd.s32 %s104, 1
      %p108 = scmp.eq.s32.totalorder %s44, 1
      %p109 = scmp.ne.s32.totalorder %s104, %s106
      %p110 = scmp.eq.s32.totalorder %s44, 0
      %p111 = por %p109, %p110
      %p112 = scmp.ne.s32.totalorder %s104, %s106
      %p113 = scmp.eq.s32.totalorder %s49, 1
      %p114 = por %p112, %p113
      %p115 = scmp.ne.s32.totalorder %s106, %s107
      %p116 = scmp.eq.s32.totalorder %s49, 0
      %p117 = por %p115, %p116
      %p118 = scmp.ne.s32.totalorder %s106, %s107
      %p119 = scmp.eq.s32.totalorder %s50, 1
      %p120 = por %p118, %p119
      %p122 = scmp.ne.s32.totalorder %s107, %s121
      %p123 = scmp.eq.s32.totalorder %s50, 0
      %p124 = por %p122, %p123
      %s126 = sadd.s32 %s125, 1
      %p129 = scmp.eq.s32.totalorder %s44, 1
      %p130 = scmp.ne.s32.totalorder %s125, %s127
      %p131 = scmp.eq.s32.totalorder %s44, 0
      %p132 = por %p130, %p131
      %p133 = scmp.ne.s32.totalorder %s125, %s127
      %p134 = scmp.eq.s32.totalorder %s49, 1
      %p135 = por %p133, %p134
      %p136 = scmp.ne.s32.totalorder %s127, %s128
      %p137 = scmp.eq.s32.totalorder %s49, 0
      %p138 = por %p136, %p137
      %p139 = scmp.ne.s32.totalorder %s127, %s128
      %p140 = scmp.eq.s32.totalorder %s50, 1
      %p141 = por %p139, %p140
      %p143 = scmp.ne.s32.totalorder %s128, %s142
      %p144 = scmp.eq.s32.totalorder %s50, 0
      %p145 = por %p143, %p144
      %s147 = sadd.s32 %s146, 1
      %p150 = scmp.eq.s32.totalorder %s44, 1
      %p151 = scmp.ne.s32.totalorder %s146, %s148
      %p152 = scmp.eq.s32.totalorder %s44, 0
      %p153 = por %p151, %p152
      %p154 = scmp.ne.s32.totalorder %s146, %s148
      %p155 = scmp.eq.s32.totalorder %s49, 1
      %p156 = por %p154, %p155
      %p157 = scmp.ne.s32.totalorder %s148, %s149
      %p158 = scmp.eq.s32.totalorder %s49, 0
      %p159 = por %p157, %p158
      %p160 = scmp.ne.s32.totalorder %s148, %s149
      %p161 = scmp.eq.s32.totalorder %s50, 1
      %p162 = por %p160, %p161
      %p164 = scmp.ne.s32.totalorder %s149, %s163
      %p165 = scmp.eq.s32.totalorder %s50, 0
      %p166 = por %p164, %p165
      %s168 = sadd.s32 %s167, 1
      %p171 = scmp.eq.s32.totalorder %s44, 1
      %p172 = scmp.ne.s32.totalorder %s167, %s169
      %p173 = scmp.eq.s32.totalorder %s44, 0
      %p174 = por %p172, %p173
      %p175 = scmp.ne.s32.totalorder %s167, %s169
      %p176 = scmp.eq.s32.totalorder %s49, 1
      %p177 = por %p175, %p176
      %p178 = scmp.ne.s32.totalorder %s169, %s170
      %p179 = scmp.eq.s32.totalorder %s49, 0
      %p180 = por %p178, %p179
      %p181 = scmp.ne.s32.totalorder %s169, %s170
      %p182 = scmp.eq.s32.totalorder %s50, 1
      %p183 = por %p181, %p182
      %p185 = scmp.ne.s32.totalorder %s170, %s184
      %p186 = scmp.eq.s32.totalorder %s50, 0
      %p187 = por %p185, %p186
      %s189 = sadd.s32 %s188, 1
      %p192 = scmp.eq.s32.totalorder %s44, 1
      %p193 = scmp.ne.s32.totalorder %s188, %s190
      %p194 = scmp.eq.s32.totalorder %s44, 0
      %p195 = por %p193, %p194
      %p196 = scmp.ne.s32.totalorder %s188, %s190
      %p197 = scmp.eq.s32.totalorder %s49, 1
      %p198 = por %p196, %p197
      %p199 = scmp.ne.s32.totalorder %s190, %s191
      %p200 = scmp.eq.s32.totalorder %s49, 0
      %p201 = por %p199, %p200
      %p202 = scmp.ne.s32.totalorder %s190, %s191
      %p203 = scmp.eq.s32.totalorder %s50, 1
      %p204 = por %p202, %p203
      %p206 = scmp.ne.s32.totalorder %s191, %s205
      %p207 = scmp.eq.s32.totalorder %s50, 0
      %p208 = por %p206, %p207
      %s210 = sadd.s32 %s209, 1
      %p213 = scmp.eq.s32.totalorder %s44, 1
      %p214 = scmp.ne.s32.totalorder %s209, %s211
      %p215 = scmp.eq.s32.totalorder %s44, 0
      %p216 = por %p214, %p215
      %p217 = scmp.ne.s32.totalorder %s209, %s211
      %p218 = scmp.eq.s32.totalorder %s49, 1
      %p219 = por %p217, %p218
      %p220 = scmp.ne.s32.totalorder %s211, %s212
      %p221 = scmp.eq.s32.totalorder %s49, 0
      %p222 = por %p220, %p221
      %p223 = scmp.ne.s32.totalorder %s211, %s212
      %p224 = scmp.eq.s32.totalorder %s50, 1
      %p225 = por %p223, %p224
      %p227 = scmp.ne.s32.totalorder %s212, %s226
      %p228 = scmp.eq.s32.totalorder %s50, 0
      %p229 = por %p227, %p228
      %s231 = sadd.s32 %s230, 1
      %p234 = scmp.eq.s32.totalorder %s44, 1
      %p235 = scmp.ne.s32.totalorder %s230, %s232
      %p236 = scmp.eq.s32.totalorder %s44, 0
      %p237 = por %p235, %p236
      %p238 = scmp.ne.s32.totalorder %s230, %s232
      %p239 = scmp.eq.s32.totalorder %s49, 1
      %p240 = por %p238, %p239
      %p241 = scmp.ne.s32.totalorder %s232, %s233
      %p242 = scmp.eq.s32.totalorder %s49, 0
      %p243 = por %p241, %p242
      %p244 = scmp.ne.s32.totalorder %s232, %s233
      %p245 = scmp.eq.s32.totalorder %s50, 1
      %p246 = por %p244, %p245
      %p248 = scmp.ne.s32.totalorder %s233, %s247
      %p249 = scmp.eq.s32.totalorder %s50, 0
      %p250 = por %p248, %p249
      %s252 = sadd.s32 %s251, 1
      %p255 = scmp.eq.s32.totalorder %s44, 1
      %p256 = scmp.ne.s32.totalorder %s251, %s253
      %p257 = scmp.eq.s32.totalorder %s44, 0
      %p258 = por %p256, %p257
      %p259 = scmp.ne.s32.totalorder %s251, %s253
      %p260 = scmp.eq.s32.totalorder %s49, 1
      %p261 = por %p259, %p260
      %p262 = scmp.ne.s32.totalorder %s253, %s254
      %p263 = scmp.eq.s32.totalorder %s49, 0
      %p264 = por %p262, %p263
      %p265 = scmp.ne.s32.totalorder %s253, %s254
      %p266 = scmp.eq.s32.totalorder %s50, 1
      %p267 = por %p265, %p266
      %p269 = scmp.ne.s32.totalorder %s254, %s268
      %p270 = scmp.eq.s32.totalorder %s50, 0
      %p271 = por %p269, %p270
      %s273 = sadd.s32 %s272, 1
      %p276 = scmp.eq.s32.totalorder %s44, 1
      %p277 = scmp.ne.s32.totalorder %s272, %s274
      %p278 = scmp.eq.s32.totalorder %s44, 0
      %p279 = por %p277, %p278
      %p280 = scmp.ne.s32.totalorder %s272, %s274
      %p281 = scmp.eq.s32.totalorder %s49, 1
      %p282 = por %p280, %p281
      %p283 = scmp.ne.s32.totalorder %s274, %s275
      %p284 = scmp.eq.s32.totalorder %s49, 0
      %p285 = por %p283, %p284
      %p286 = scmp.ne.s32.totalorder %s274, %s275
      %p287 = scmp.eq.s32.totalorder %s50, 1
      %p288 = por %p286, %p287
      %p290 = scmp.ne.s32.totalorder %s275, %s289
      %p291 = scmp.eq.s32.totalorder %s50, 0
      %p292 = por %p290, %p291
      %s294 = sadd.s32 %s293, 1
      %p297 = scmp.eq.s32.totalorder %s44, 1
      %p298 = scmp.ne.s32.totalorder %s293, %s295
      %p299 = scmp.eq.s32.totalorder %s44, 0
      %p300 = por %p298, %p299
      %p301 = scmp.ne.s32.totalorder %s293, %s295
      %p302 = scmp.eq.s32.totalorder %s49, 1
      %p303 = por %p301, %p302
      %p304 = scmp.ne.s32.totalorder %s295, %s296
      %p305 = scmp.eq.s32.totalorder %s49, 0
      %p306 = por %p304, %p305
      %p307 = scmp.ne.s32.totalorder %s295, %s296
      %p308 = scmp.eq.s32.totalorder %s50, 1
      %p309 = por %p307, %p308
      %p311 = scmp.ne.s32.totalorder %s296, %s310
      %p312 = scmp.eq.s32.totalorder %s50, 0
      %p313 = por %p311, %p312
      %s315 = sadd.s32 %s314, 1
      %p318 = scmp.eq.s32.totalorder %s44, 1
      %p319 = scmp.ne.s32.totalorder %s314, %s316
      %p320 = scmp.eq.s32.totalorder %s44, 0
      %p321 = por %p319, %p320
      %p322 = scmp.ne.s32.totalorder %s314, %s316
      %p323 = scmp.eq.s32.totalorder %s49, 1
      %p324 = por %p322, %p323
      %p325 = scmp.ne.s32.totalorder %s316, %s317
      %p326 = scmp.eq.s32.totalorder %s49, 0
      %p327 = por %p325, %p326
      %p328 = scmp.ne.s32.totalorder %s316, %s317
      %p329 = scmp.eq.s32.totalorder %s50, 1
      %p330 = por %p328, %p329
      %p332 = scmp.ne.s32.totalorder %s317, %s331
      %p333 = scmp.eq.s32.totalorder %s50, 0
      %p334 = por %p332, %p333
      %s336 = sadd.s32 %s335, 1
      %p339 = scmp.eq.s32.totalorder %s44, 1
      %p340 = scmp.ne.s32.totalorder %s335, %s337
      %p341 = scmp.eq.s32.totalorder %s44, 0
      %p342 = por %p340, %p341
      %p343 = scmp.ne.s32.totalorder %s335, %s337
      %p344 = scmp.eq.s32.totalorder %s49, 1
      %p345 = por %p343, %p344
      %p346 = scmp.ne.s32.totalorder %s337, %s338
      %p347 = scmp.eq.s32.totalorder %s49, 0
      %p348 = por %p346, %p347
      %p349 = scmp.ne.s32.totalorder %s337, %s338
      %p350 = scmp.eq.s32.totalorder %s50, 1
      %p351 = por %p349, %p350
      %p353 = scmp.ne.s32.totalorder %s338, %s352
      %p354 = scmp.eq.s32.totalorder %s50, 0
      %p355 = por %p353, %p354
      %s357 = sadd.s32 %s356, 1
      %p360 = scmp.eq.s32.totalorder %s44, 1
      %p361 = scmp.ne.s32.totalorder %s356, %s358
      %p362 = scmp.eq.s32.totalorder %s44, 0
      %p363 = por %p361, %p362
      %p364 = scmp.ne.s32.totalorder %s356, %s358
      %p365 = scmp.eq.s32.totalorder %s49, 1
      %p366 = por %p364, %p365
      %p367 = scmp.ne.s32.totalorder %s358, %s359
      %p368 = scmp.eq.s32.totalorder %s49, 0
      %p369 = por %p367, %p368
      %p370 = scmp.ne.s32.totalorder %s358, %s359
      %p371 = scmp.eq.s32.totalorder %s50, 1
      %p372 = por %p370, %p371
      %p374 = scmp.ne.s32.totalorder %s359, %s373
      %p375 = scmp.eq.s32.totalorder %s50, 0
      %p376 = por %p374, %p375
      %s378 = sadd.s32 %s377, 1
      %p381 = scmp.eq.s32.totalorder %s44, 1
      %p382 = scmp.ne.s32.totalorder %s377, %s379
      %p383 = scmp.eq.s32.totalorder %s44, 0
      %p384 = por %p382, %p383
      %p385 = scmp.ne.s32.totalorder %s377, %s379
      %p386 = scmp.eq.s32.totalorder %s49, 1
      %p387 = por %p385, %p386
      %p388 = scmp.ne.s32.totalorder %s379, %s380
      %p389 = scmp.eq.s32.totalorder %s49, 0
      %p390 = por %p388, %p389
      %p391 = scmp.ne.s32.totalorder %s379, %s380
      %p392 = scmp.eq.s32.totalorder %s50, 1
      %p393 = por %p391, %p392
      %p395 = scmp.ne.s32.totalorder %s380, %s394
      %p396 = scmp.eq.s32.totalorder %s50, 0
      %p397 = por %p395, %p396
      %s399 = sadd.s32 %s398, 1
      %p402 = scmp.eq.s32.totalorder %s44, 1
      %p403 = scmp.ne.s32.totalorder %s398, %s400
      %p404 = scmp.eq.s32.totalorder %s44, 0
      %p405 = por %p403, %p404
      %p406 = scmp.ne.s32.totalorder %s398, %s400
      %p407 = scmp.eq.s32.totalorder %s49, 1
      %p408 = por %p406, %p407
      %p409 = scmp.ne.s32.totalorder %s400, %s401
      %p410 = scmp.eq.s32.totalorder %s49, 0
      %p411 = por %p409, %p410
      %p412 = scmp.ne.s32.totalorder %s400, %s401
      %p413 = scmp.eq.s32.totalorder %s50, 1
      %p414 = por %p412, %p413
      %p416 = scmp.ne.s32.totalorder %s401, %s415
      %p417 = scmp.eq.s32.totalorder %s50, 0
      %p418 = por %p416, %p417
      %s420 = sadd.s32 %s419, 1
      %p423 = scmp.eq.s32.totalorder %s44, 1
      %p424 = scmp.ne.s32.totalorder %s419, %s421
      %p425 = scmp.eq.s32.totalorder %s44, 0
      %p426 = por %p424, %p425
      %p427 = scmp.ne.s32.totalorder %s419, %s421
      %p428 = scmp.eq.s32.totalorder %s49, 1
      %p429 = por %p427, %p428
      %p430 = scmp.ne.s32.totalorder %s421, %s422
      %p431 = scmp.eq.s32.totalorder %s49, 0
      %p432 = por %p430, %p431
      %p433 = scmp.ne.s32.totalorder %s421, %s422
      %p434 = scmp.eq.s32.totalorder %s50, 1
      %p435 = por %p433, %p434
      %p437 = scmp.ne.s32.totalorder %s422, %s436
      %p438 = scmp.eq.s32.totalorder %s50, 0
      %p439 = por %p437, %p438
      %s441 = sadd.s32 %s440, 1
      %p444 = scmp.eq.s32.totalorder %s44, 1
      %p445 = scmp.ne.s32.totalorder %s440, %s442
      %p446 = scmp.eq.s32.totalorder %s44, 0
      %p447 = por %p445, %p446
      %p448 = scmp.ne.s32.totalorder %s440, %s442
      %p449 = scmp.eq.s32.totalorder %s49, 1
      %p450 = por %p448, %p449
      %p451 = scmp.ne.s32.totalorder %s442, %s443
      %p452 = scmp.eq.s32.totalorder %s49, 0
      %p453 = por %p451, %p452
      %p454 = scmp.ne.s32.totalorder %s442, %s443
      %p455 = scmp.eq.s32.totalorder %s50, 1
      %p456 = por %p454, %p455
      %p458 = scmp.ne.s32.totalorder %s443, %s457
      %p459 = scmp.eq.s32.totalorder %s50, 0
      %p460 = por %p458, %p459
      %s462 = sadd.s32 %s461, 1
      %p465 = scmp.eq.s32.totalorder %s44, 1
      %p466 = scmp.ne.s32.totalorder %s461, %s463
      %p467 = scmp.eq.s32.totalorder %s44, 0
      %p468 = por %p466, %p467
      %p469 = scmp.ne.s32.totalorder %s461, %s463
      %p470 = scmp.eq.s32.totalorder %s49, 1
      %p471 = por %p469, %p470
      %p472 = scmp.ne.s32.totalorder %s463, %s464
      %p473 = scmp.eq.s32.totalorder %s49, 0
      %p474 = por %p472, %p473
      %p475 = scmp.ne.s32.totalorder %s463, %s464
      %p476 = scmp.eq.s32.totalorder %s50, 1
      %p477 = por %p475, %p476
      %p479 = scmp.ne.s32.totalorder %s464, %s478
      %p480 = scmp.eq.s32.totalorder %s50, 0
      %p481 = por %p479, %p480
      %s482 = ssub.s32 %s44, %s51
      %p483 = scmp.eq.s32.totalorder %s482, 0
      %s485 = sadd.s32 %s484, 1
      %s486 = scalar_select %p483, %s484, %s485
      %p489 = pneg %p483
      %p490 = scmp.eq.s32.totalorder %s44, 1
      %p491 = por %p489, %p490
      %p492 = scmp.ne.s32.totalorder %s484, %s487
      %p493 = scmp.eq.s32.totalorder %s44, 0
      %p494 = por %p492, %p493
      %p495 = scmp.ne.s32.totalorder %s484, %s487
      %p496 = scmp.eq.s32.totalorder %s49, 1
      %p497 = por %p495, %p496
      %p498 = scmp.ne.s32.totalorder %s487, %s488
      %p499 = scmp.eq.s32.totalorder %s49, 0
      %p500 = por %p498, %p499
      %p501 = scmp.ne.s32.totalorder %s487, %s488
      %p502 = scmp.eq.s32.totalorder %s50, 1
      %p503 = por %p501, %p502
      %p505 = scmp.ne.s32.totalorder %s488, %s504
      %p506 = scmp.eq.s32.totalorder %s50, 0
      %p507 = por %p505, %p506
      %s508 = ssub.s32 %s44, %s51
      %p509 = scmp.eq.s32.totalorder %s508, 0
      %s511 = sadd.s32 %s510, 1
      %s512 = scalar_select %p509, %s510, %s511
      %p515 = pneg %p509
      %p516 = scmp.eq.s32.totalorder %s44, 1
      %p517 = por %p515, %p516
      %p518 = scmp.ne.s32.totalorder %s510, %s513
      %p519 = scmp.eq.s32.totalorder %s44, 0
      %p520 = por %p518, %p519
      %p521 = scmp.ne.s32.totalorder %s510, %s513
      %p522 = scmp.eq.s32.totalorder %s49, 1
      %p523 = por %p521, %p522
      %p524 = scmp.ne.s32.totalorder %s513, %s514
      %p525 = scmp.eq.s32.totalorder %s49, 0
      %p526 = por %p524, %p525
      %p527 = scmp.ne.s32.totalorder %s513, %s514
      %p528 = scmp.eq.s32.totalorder %s50, 1
      %p529 = por %p527, %p528
      %p531 = scmp.ne.s32.totalorder %s514, %s530
      %p532 = scmp.eq.s32.totalorder %s50, 0
      %p533 = por %p531, %p532
      %p534 = scmp.le.s32.totalorder 1, %s44
      %p535 = scmp.lt.s32.totalorder %s44, 3
      %p536 = pnand %p534, %p535
      %p537 = pneg %p536
      // Predicated region
      $region9: #{tpu_custom_call.1} parent=5 // pred_check
        _
      $region10: #{tpu_custom_call.1} parent=5 // pred_check_branch
        %539 = sbr.rel (%p536) target = $region12
      $region11: #{tpu_custom_call.1} parent=5 // pred_region
        %s540 = ssub.s32 %s44, 1
        // Predicated region
        $region13: #{tpu_custom_call.1} parent=11 // pred_check
          %p541 = pneg %p117
        $region14: #{tpu_custom_call.1} parent=11 // pred_check_branch
          %543 = sbr.rel (%p541) target = $region16
        $region15: #{tpu_custom_call.1} parent=11 // pred_region
          %s545 = ssub.s32 1024, 1024
          %546 = vsyncadd [#allocation6], %s545
          %s547 = sshll.u32 [#allocation7], 4
          %s548 = int_to_ptr.vmem [resolvable:$true] %s547
          %553 = dma.hbm_to_vmem [thread:$0]  %s2, 1024, %s548, [#allocation6], 64, 64, 4
        $region16: #{tpu_custom_call.1} parent=11 // pred_fallthru
          _
        // Predicated region
        $region17: #{tpu_custom_call.1} parent=11 // pred_check
          %p554 = pneg %p138
        $region18: #{tpu_custom_call.1} parent=11 // pred_check_branch
          %556 = sbr.rel (%p554) target = $region20
        $region19: #{tpu_custom_call.1} parent=11 // pred_region
          %s558 = ssub.s32 1024, 1024
          %559 = vsyncadd [#allocation9], %s558
          %s560 = sshll.u32 [#allocation8], 4
          %s561 = int_to_ptr.vmem [resolvable:$true] %s560
          %566 = dma.hbm_to_vmem [thread:$0]  %s3, 1024, %s561, [#allocation9], 64, 64, 4
        $region20: #{tpu_custom_call.1} parent=11 // pred_fallthru
          _
        // Predicated region
        $region21: #{tpu_custom_call.1} parent=11 // pred_check
          %p567 = pneg %p159
        $region22: #{tpu_custom_call.1} parent=11 // pred_check_branch
          %569 = sbr.rel (%p567) target = $region24
        $region23: #{tpu_custom_call.1} parent=11 // pred_region
          _
        $region24: #{tpu_custom_call.1} parent=11 // pred_fallthru
          _
        // Predicated region
        $region25: #{tpu_custom_call.1} parent=11 // pred_check
          %p570 = pneg %p180
        $region26: #{tpu_custom_call.1} parent=11 // pred_check_branch
          %572 = sbr.rel (%p570) target = $region28
        $region27: #{tpu_custom_call.1} parent=11 // pred_region
          %s574 = ssub.s32 1024, 1024
          %575 = vsyncadd [#allocation9], %s574
          %s576 = sshll.u32 [#allocation10], 4
          %s577 = int_to_ptr.vmem [resolvable:$true] %s576
          %582 = dma.hbm_to_vmem [thread:$0]  %s5, 1024, %s577, [#allocation9], 64, 64, 4
        $region28: #{tpu_custom_call.1} parent=11 // pred_fallthru
          _
        // Predicated region
        $region29: #{tpu_custom_call.1} parent=11 // pred_check
          %p583 = pneg %p201
        $region30: #{tpu_custom_call.1} parent=11 // pred_check_branch
          %585 = sbr.rel (%p583) target = $region32
        $region31: #{tpu_custom_call.1} parent=11 // pred_region
          _
        $region32: #{tpu_custom_call.1} parent=11 // pred_fallthru
          _
        // Predicated region
        $region33: #{tpu_custom_call.1} parent=11 // pred_check
          %p586 = pneg %p222
        $region34: #{tpu_custom_call.1} parent=11 // pred_check_branch
          %588 = sbr.rel (%p586) target = $region36
        $region35: #{tpu_custom_call.1} parent=11 // pred_region
          %s590 = ssub.s32 1024, 1024
          %591 = vsyncadd [#allocation12], %s590
          %s592 = sshll.u32 [#allocation11], 4
          %s593 = int_to_ptr.vmem [resolvable:$true] %s592
          %598 = dma.hbm_to_vmem [thread:$0]  %s7, 1024, %s593, [#allocation12], 64, 64, 4
        $region36: #{tpu_custom_call.1} parent=11 // pred_fallthru
          _
        // Predicated region
        $region37: #{tpu_custom_call.1} parent=11 // pred_check
          %p599 = pneg %p243
        $region38: #{tpu_custom_call.1} parent=11 // pred_check_branch
          %601 = sbr.rel (%p599) target = $region40
        $region39: #{tpu_custom_call.1} parent=11 // pred_region
          _
        $region40: #{tpu_custom_call.1} parent=11 // pred_fallthru
          _
        // Predicated region
        $region41: #{tpu_custom_call.1} parent=11 // pred_check
          %p602 = pneg %p264
        $region42: #{tpu_custom_call.1} parent=11 // pred_check_branch
          %604 = sbr.rel (%p602) target = $region44
        $region43: #{tpu_custom_call.1} parent=11 // pred_region
          %s606 = ssub.s32 1024, 1024
          %607 = vsyncadd [#allocation12], %s606
          %s608 = sshll.u32 [#allocation13], 4
          %s609 = int_to_ptr.vmem [resolvable:$true] %s608
          %614 = dma.hbm_to_vmem [thread:$0]  %s9, 1024, %s609, [#allocation12], 64, 64, 4
        $region44: #{tpu_custom_call.1} parent=11 // pred_fallthru
          _
        // Predicated region
        $region45: #{tpu_custom_call.1} parent=11 // pred_check
          %p615 = pneg %p285
        $region46: #{tpu_custom_call.1} parent=11 // pred_check_branch
          %617 = sbr.rel (%p615) target = $region48
        $region47: #{tpu_custom_call.1} parent=11 // pred_region
          _
        $region48: #{tpu_custom_call.1} parent=11 // pred_fallthru
          _
        // Predicated region
        $region49: #{tpu_custom_call.1} parent=11 // pred_check
          %p618 = pneg %p306
        $region50: #{tpu_custom_call.1} parent=11 // pred_check_branch
          %620 = sbr.rel (%p618) target = $region52
        $region51: #{tpu_custom_call.1} parent=11 // pred_region
          %s622 = ssub.s32 1024, 1024
          %623 = vsyncadd [#allocation15], %s622
          %s624 = sshll.u32 [#allocation14], 4
          %s625 = int_to_ptr.vmem [resolvable:$true] %s624
          %630 = dma.hbm_to_vmem [thread:$0]  %s11, 1024, %s625, [#allocation15], 64, 64, 4
        $region52: #{tpu_custom_call.1} parent=11 // pred_fallthru
          _
        // Predicated region
        $region53: #{tpu_custom_call.1} parent=11 // pred_check
          %p631 = pneg %p327
        $region54: #{tpu_custom_call.1} parent=11 // pred_check_branch
          %633 = sbr.rel (%p631) target = $region56
        $region55: #{tpu_custom_call.1} parent=11 // pred_region
          _
        $region56: #{tpu_custom_call.1} parent=11 // pred_fallthru
          _
        // Predicated region
        $region57: #{tpu_custom_call.1} parent=11 // pred_check
          %p634 = pneg %p348
        $region58: #{tpu_custom_call.1} parent=11 // pred_check_branch
          %636 = sbr.rel (%p634) target = $region60
        $region59: #{tpu_custom_call.1} parent=11 // pred_region
          %s638 = ssub.s32 1024, 1024
          %639 = vsyncadd [#allocation15], %s638
          %s640 = sshll.u32 [#allocation16], 4
          %s641 = int_to_ptr.vmem [resolvable:$true] %s640
          %646 = dma.hbm_to_vmem [thread:$0]  %s13, 1024, %s641, [#allocation15], 64, 64, 4
        $region60: #{tpu_custom_call.1} parent=11 // pred_fallthru
          _
        // Predicated region
        $region61: #{tpu_custom_call.1} parent=11 // pred_check
          %p647 = pneg %p369
        $region62: #{tpu_custom_call.1} parent=11 // pred_check_branch
          %649 = sbr.rel (%p647) target = $region64
        $region63: #{tpu_custom_call.1} parent=11 // pred_region
          _
        $region64: #{tpu_custom_call.1} parent=11 // pred_fallthru
          _
        // Predicated region
        $region65: #{tpu_custom_call.1} parent=11 // pred_check
          %p650 = pneg %p390
        $region66: #{tpu_custom_call.1} parent=11 // pred_check_branch
          %652 = sbr.rel (%p650) target = $region68
        $region67: #{tpu_custom_call.1} parent=11 // pred_region
          %s654 = ssub.s32 1024, 1024
          %655 = vsyncadd [#allocation18], %s654
          %s656 = sshll.u32 [#allocation17], 4
          %s657 = int_to_ptr.vmem [resolvable:$true] %s656
          %662 = dma.hbm_to_vmem [thread:$0]  %s15, 1024, %s657, [#allocation18], 64, 64, 4
        $region68: #{tpu_custom_call.1} parent=11 // pred_fallthru
          _
        // Predicated region
        $region69: #{tpu_custom_call.1} parent=11 // pred_check
          %p663 = pneg %p411
        $region70: #{tpu_custom_call.1} parent=11 // pred_check_branch
          %665 = sbr.rel (%p663) target = $region72
        $region71: #{tpu_custom_call.1} parent=11 // pred_region
          _
        $region72: #{tpu_custom_call.1} parent=11 // pred_fallthru
          _
        // Predicated region
        $region73: #{tpu_custom_call.1} parent=11 // pred_check
          %p666 = pneg %p432
        $region74: #{tpu_custom_call.1} parent=11 // pred_check_branch
          %668 = sbr.rel (%p666) target = $region76
        $region75: #{tpu_custom_call.1} parent=11 // pred_region
          %s670 = ssub.s32 1024, 1024
          %671 = vsyncadd [#allocation18], %s670
          %s672 = sshll.u32 [#allocation19], 4
          %s673 = int_to_ptr.vmem [resolvable:$true] %s672
          %678 = dma.hbm_to_vmem [thread:$0]  %s17, 1024, %s673, [#allocation18], 64, 64, 4
        $region76: #{tpu_custom_call.1} parent=11 // pred_fallthru
          _
        // Predicated region
        $region77: #{tpu_custom_call.1} parent=11 // pred_check
          %p679 = pneg %p453
        $region78: #{tpu_custom_call.1} parent=11 // pred_check_branch
          %681 = sbr.rel (%p679) target = $region80
        $region79: #{tpu_custom_call.1} parent=11 // pred_region
          _
        $region80: #{tpu_custom_call.1} parent=11 // pred_fallthru
          _
        // Predicated region
        $region81: #{tpu_custom_call.1} parent=11 // pred_check
          %p682 = pneg %p474
        $region82: #{tpu_custom_call.1} parent=11 // pred_check_branch
          %684 = sbr.rel (%p682) target = $region84
        $region83: #{tpu_custom_call.1} parent=11 // pred_region
          _
        $region84: #{tpu_custom_call.1} parent=11 // pred_fallthru
          _
      $region12: #{tpu_custom_call.1} parent=5 // pred_fallthru
        _
      %p685 = scmp.lt.s32.totalorder %s44, 2
      // Predicated region
      $region85: #{tpu_custom_call.1} parent=5 // pred_check
        %p686 = pneg %p685
      $region86: #{tpu_custom_call.1} parent=5 // pred_check_branch
        %688 = sbr.rel (%p686) target = $region88
      $region87: #{tpu_custom_call.1} parent=5 // pred_region
        // Predicated region
        $region89: #{tpu_custom_call.1} parent=87 // pred_check
          %p689 = pneg %p64
        $region90: #{tpu_custom_call.1} parent=87 // pred_check_branch
          %691 = sbr.rel (%p689) target = $region92
        $region91: #{tpu_custom_call.1} parent=87 // pred_region
          %s692 = sand.u32 %s54, 1
          %s693 = scalar_lea.sflag [#allocation3], %s692
          %s694 = sand.u32 %s54, 1
          %s695 = smul.addr %s694, 4
          %s696 = scalar_lea.vmem [#allocation2], %s695
          %s698 = ssub.s32 64, 64
          %699 = vsyncadd %s693, %s698
          %s700 = smul.addr %s44, 64
          %s701 = scalar_lea.hbm %s0, %s700
          %s703 = sshll.u32 %s696, 4
          %s704 = int_to_ptr.vmem [resolvable:$true] %s703
          %706 = dma.hbm_to_vmem [thread:$0]  %s701, 64, %s704, %s693
        $region92: #{tpu_custom_call.1} parent=87 // pred_fallthru
          _
        // Predicated region
        $region93: #{tpu_custom_call.1} parent=87 // pred_check
          %p707 = pneg %p90
        $region94: #{tpu_custom_call.1} parent=87 // pred_check_branch
          %709 = sbr.rel (%p707) target = $region96
        $region95: #{tpu_custom_call.1} parent=87 // pred_region
          %s710 = sand.u32 %s44, 1
          %s711 = scalar_lea.sflag [#allocation6], %s710
          %s712 = sand.u32 %s80, 1
          %s713 = smul.addr %s712, 4
          %s714 = scalar_lea.vmem [#allocation5], %s713
          %s716 = ssub.s32 64, 64
          %717 = vsyncadd %s711, %s716
          %s718 = smul.addr %s44, 64
          %s719 = scalar_lea.hbm %s1, %s718
          %s721 = sshll.u32 %s714, 4
          %s722 = int_to_ptr.vmem [resolvable:$true] %s721
          %724 = dma.hbm_to_vmem [thread:$0]  %s719, 64, %s722, %s711
        $region96: #{tpu_custom_call.1} parent=87 // pred_fallthru
          _
      $region88: #{tpu_custom_call.1} parent=5 // pred_fallthru
        _
      %p725 = scmp.le.s32.totalorder 1, %s44
      %p726 = scmp.lt.s32.totalorder %s44, 3
      %p727 = pnand %p725, %p726
      %p728 = pneg %p727
      // Predicated region
      $region97: #{tpu_custom_call.1} parent=5 // pred_check
        _
      $region98: #{tpu_custom_call.1} parent=5 // pred_check_branch
        %730 = sbr.rel (%p727) target = $region100
      $region99: #{tpu_custom_call.1} parent=5 // pred_region
        %s731 = ssub.s32 %s44, 1
        %s732 = sand.u32 %s57, 1
        %s733 = scalar_lea.sflag [#allocation3], %s732
        %s734 = sand.u32 %s57, 1
        %s735 = smul.addr %s734, 4
        %s736 = scalar_lea.vmem [#allocation2], %s735
        // Predicated region
        $region101: #{tpu_custom_call.1} parent=99 // pred_check
          %p737 = pneg %p70
        $region102: #{tpu_custom_call.1} parent=99 // pred_check_branch
          %739 = sbr.rel (%p737) target = $region104
        $region103: #{tpu_custom_call.1} parent=99 // pred_region
          %740 = dma.done %s733, 64
        $region104: #{tpu_custom_call.1} parent=99 // pred_fallthru
          _
        %s741 = sand.u32 %s49, 1
        %s742 = scalar_lea.sflag [#allocation6], %s741
        %s743 = sand.u32 %s83, 1
        %s744 = smul.addr %s743, 4
        %s745 = scalar_lea.vmem [#allocation5], %s744
        // Predicated region
        $region105: #{tpu_custom_call.1} parent=99 // pred_check
          %p746 = pneg %p96
        $region106: #{tpu_custom_call.1} parent=99 // pred_check_branch
          %748 = sbr.rel (%p746) target = $region108
        $region107: #{tpu_custom_call.1} parent=99 // pred_region
          %749 = dma.done %s742, 64
        $region108: #{tpu_custom_call.1} parent=99 // pred_fallthru
          _
        // Predicated region
        $region109: #{tpu_custom_call.1} parent=99 // pred_check
          %p750 = pneg %p117
        $region110: #{tpu_custom_call.1} parent=99 // pred_check_branch
          %752 = sbr.rel (%p750) target = $region112
        $region111: #{tpu_custom_call.1} parent=99 // pred_region
          %753 = dma.done [#allocation6], 1024
        $region112: #{tpu_custom_call.1} parent=99 // pred_fallthru
          _
        // Predicated region
        $region113: #{tpu_custom_call.1} parent=99 // pred_check
          %p754 = pneg %p138
        $region114: #{tpu_custom_call.1} parent=99 // pred_check_branch
          %756 = sbr.rel (%p754) target = $region116
        $region115: #{tpu_custom_call.1} parent=99 // pred_region
          %757 = dma.done [#allocation9], 1024
        $region116: #{tpu_custom_call.1} parent=99 // pred_fallthru
          _
        // Predicated region
        $region117: #{tpu_custom_call.1} parent=99 // pred_check
          %p758 = pneg %p180
        $region118: #{tpu_custom_call.1} parent=99 // pred_check_branch
          %760 = sbr.rel (%p758) target = $region120
        $region119: #{tpu_custom_call.1} parent=99 // pred_region
          %761 = dma.done [#allocation9], 1024
        $region120: #{tpu_custom_call.1} parent=99 // pred_fallthru
          _
        // Predicated region
        $region121: #{tpu_custom_call.1} parent=99 // pred_check
          %p762 = pneg %p222
        $region122: #{tpu_custom_call.1} parent=99 // pred_check_branch
          %764 = sbr.rel (%p762) target = $region124
        $region123: #{tpu_custom_call.1} parent=99 // pred_region
          %765 = dma.done [#allocation12], 1024
        $region124: #{tpu_custom_call.1} parent=99 // pred_fallthru
          _
        // Predicated region
        $region125: #{tpu_custom_call.1} parent=99 // pred_check
          %p766 = pneg %p264
        $region126: #{tpu_custom_call.1} parent=99 // pred_check_branch
          %768 = sbr.rel (%p766) target = $region128
        $region127: #{tpu_custom_call.1} parent=99 // pred_region
          %769 = dma.done [#allocation12], 1024
        $region128: #{tpu_custom_call.1} parent=99 // pred_fallthru
          _
        // Predicated region
        $region129: #{tpu_custom_call.1} parent=99 // pred_check
          %p770 = pneg %p306
        $region130: #{tpu_custom_call.1} parent=99 // pred_check_branch
          %772 = sbr.rel (%p770) target = $region132
        $region131: #{tpu_custom_call.1} parent=99 // pred_region
          %773 = dma.done [#allocation15], 1024
        $region132: #{tpu_custom_call.1} parent=99 // pred_fallthru
          _
        // Predicated region
        $region133: #{tpu_custom_call.1} parent=99 // pred_check
          %p774 = pneg %p348
        $region134: #{tpu_custom_call.1} parent=99 // pred_check_branch
          %776 = sbr.rel (%p774) target = $region136
        $region135: #{tpu_custom_call.1} parent=99 // pred_region
          %777 = dma.done [#allocation15], 1024
        $region136: #{tpu_custom_call.1} parent=99 // pred_fallthru
          _
        // Predicated region
        $region137: #{tpu_custom_call.1} parent=99 // pred_check
          %p778 = pneg %p390
        $region138: #{tpu_custom_call.1} parent=99 // pred_check_branch
          %780 = sbr.rel (%p778) target = $region140
        $region139: #{tpu_custom_call.1} parent=99 // pred_region
          %781 = dma.done [#allocation18], 1024
        $region140: #{tpu_custom_call.1} parent=99 // pred_fallthru
          _
        // Predicated region
        $region141: #{tpu_custom_call.1} parent=99 // pred_check
          %p782 = pneg %p432
        $region142: #{tpu_custom_call.1} parent=99 // pred_check_branch
          %784 = sbr.rel (%p782) target = $region144
        $region143: #{tpu_custom_call.1} parent=99 // pred_region
          %785 = dma.done [#allocation18], 1024
        $region144: #{tpu_custom_call.1} parent=99 // pred_fallthru
          _
        %s786 = sand.u32 %s57, 1
        %s787 = scalar_lea.sflag [#allocation3], %s786
        %s788 = sand.u32 %s57, 1
        %s789 = smul.addr %s788, 4
        %s790 = scalar_lea.vmem [#allocation2], %s789
        %p791 = pneg %p70
        %p792 = pneg %p67
        %s793 = sand.u32 %s49, 1
        %s794 = scalar_lea.sflag [#allocation6], %s793
        %s795 = sand.u32 %s83, 1
        %s796 = smul.addr %s795, 4
        %s797 = scalar_lea.vmem [#allocation5], %s796
        %p798 = pneg %p96
        %p799 = pneg %p93
        %p800 = pneg %p117
        %p801 = pneg %p114
        %p802 = pneg %p138
        %p803 = pneg %p135
        %p804 = pneg %p159
        %p805 = pneg %p156
        %p806 = pneg %p180
        %p807 = pneg %p177
        %p808 = pneg %p201
        %p809 = pneg %p198
        %p810 = pneg %p222
        %p811 = pneg %p219
        %p812 = pneg %p243
        %p813 = pneg %p240
        %p814 = pneg %p264
        %p815 = pneg %p261
        %p816 = pneg %p285
        %p817 = pneg %p282
        %p818 = pneg %p306
        %p819 = pneg %p303
        %p820 = pneg %p327
        %p821 = pneg %p324
        %p822 = pneg %p348
        %p823 = pneg %p345
        %p824 = pneg %p369
        %p825 = pneg %p366
        %p826 = pneg %p390
        %p827 = pneg %p387
        %p828 = pneg %p411
        %p829 = pneg %p408
        %p830 = pneg %p432
        %p831 = pneg %p429
        %p832 = pneg %p453
        %p833 = pneg %p450
        %p834 = pneg %p474
        %p835 = pneg %p471
        %p836 = pneg %p500
        %p837 = pneg %p497
        %s838 = sand.u32 %s487, 1
        %s839 = scalar_lea.sflag [#allocation4], %s838
        %s840 = sand.u32 %s487, 1
        %s841 = smul.addr %s840, 8
        %s842 = scalar_lea.vmem [#allocation20], %s841
        %p843 = pneg %p526
        %p844 = pneg %p523
        %s845 = sand.u32 %s513, 1
        %s846 = scalar_lea.sflag [#allocation22], %s845
        %s847 = sand.u32 %s513, 1
        %s848 = smul.addr %s847, 4
        %s849 = scalar_lea.vmem [#allocation21], %s848
        %v851 = vld [vmem:[%s745] sm:$0xf]
        %v852 = vunpack.c.l.bf16 %v851
        %v853 = vld [vmem:[%s736] sm:$0xf]
        %v854 = vunpack.c.l.bf16 %v853
        %v855 = vmul.f32 %v854, %v852
        %v856 = vpack.c.bf16 %v855, %v855
        %v857 = vld [vmem:[#allocation7] sm:$0xf]
        %v858 = vld [vmem:[#allocation7 + $0x4] sm:$0xf]
        %v859 = vld [vmem:[#allocation7 + $0x8] sm:$0xf]
        %v860 = vld [vmem:[#allocation7 + $0xc] sm:$0xf]
        %v861 = vld [vmem:[#allocation7 + $0x10] sm:$0xf]
        %v862 = vld [vmem:[#allocation7 + $0x14] sm:$0xf]
        %v863 = vld [vmem:[#allocation7 + $0x18] sm:$0xf]
        %v864 = vld [vmem:[#allocation7 + $0x1c] sm:$0xf]
        %v865 = vld [vmem:[#allocation7 + $0x20] sm:$0xf]
        %v866 = vld [vmem:[#allocation7 + $0x24] sm:$0xf]
        %v867 = vld [vmem:[#allocation7 + $0x28] sm:$0xf]
        %v868 = vld [vmem:[#allocation7 + $0x2c] sm:$0xf]
        %v869 = vld [vmem:[#allocation7 + $0x30] sm:$0xf]
        %v870 = vld [vmem:[#allocation7 + $0x34] sm:$0xf]
        %v871 = vld [vmem:[#allocation7 + $0x38] sm:$0xf]
        %v872 = vld [vmem:[#allocation7 + $0x3c] sm:$0xf]
        %v873 = vld [vmem:[#allocation8] sm:$0xf]
        %v874 = vld [vmem:[#allocation8 + $0x4] sm:$0xf]
        %v875 = vld [vmem:[#allocation8 + $0x8] sm:$0xf]
        %v876 = vld [vmem:[#allocation8 + $0xc] sm:$0xf]
        %v877 = vld [vmem:[#allocation8 + $0x10] sm:$0xf]
        %v878 = vld [vmem:[#allocation8 + $0x14] sm:$0xf]
        %v879 = vld [vmem:[#allocation8 + $0x18] sm:$0xf]
        %v880 = vld [vmem:[#allocation8 + $0x1c] sm:$0xf]
        %v881 = vld [vmem:[#allocation8 + $0x20] sm:$0xf]
        %v882 = vld [vmem:[#allocation8 + $0x24] sm:$0xf]
        %v883 = vld [vmem:[#allocation8 + $0x28] sm:$0xf]
        %v884 = vld [vmem:[#allocation8 + $0x2c] sm:$0xf]
        %v885 = vld [vmem:[#allocation8 + $0x30] sm:$0xf]
        %v886 = vld [vmem:[#allocation8 + $0x34] sm:$0xf]
        %v887 = vld [vmem:[#allocation8 + $0x38] sm:$0xf]
        %v888 = vld [vmem:[#allocation8 + $0x3c] sm:$0xf]
        %v905 = vunpack.c.l.b16 %v873
        %v906 = vunpack.c.l.b16 %v874
        %v907 = vunpack.c.l.b16 %v875
        %v908 = vunpack.c.l.b16 %v876
        %v909 = vunpack.c.l.b16 %v877
        %v910 = vunpack.c.l.b16 %v878
        %v911 = vunpack.c.l.b16 %v879
        %v912 = vunpack.c.l.b16 %v880
        %v913 = vunpack.c.l.b16 %v881
        %v914 = vunpack.c.l.b16 %v882
        %v915 = vunpack.c.l.b16 %v883
        %v916 = vunpack.c.l.b16 %v884
        %v917 = vunpack.c.l.b16 %v885
        %v918 = vunpack.c.l.b16 %v886
        %v919 = vunpack.c.l.b16 %v887
        %v920 = vunpack.c.l.b16 %v888
        %v921 = vpack.c.b16 %v906, %v905
        %v922 = vpack.c.b16 %v908, %v907
        %v923 = vpack.c.b16 %v910, %v909
        %v924 = vpack.c.b16 %v912, %v911
        %v925 = vpack.c.b16 %v914, %v913
        %v926 = vpack.c.b16 %v916, %v915
        %v927 = vpack.c.b16 %v918, %v917
        %v928 = vpack.c.b16 %v920, %v919
        %937 = vmatprep.subr.bf16.mxu0 0
        %938 = vmatpush1.bf16.msra.mxu0 %v928
        %939 = vmatprep.subr.bf16.mxu0 0
        %940 = vmatpush1.bf16.msra.mxu0 %v927
        %941 = vmatprep.subr.bf16.mxu0 0
        %942 = vmatpush1.bf16.msra.mxu0 %v926
        %943 = vmatprep.subr.bf16.mxu0 0
        %944 = vmatpush1.bf16.msra.mxu0 %v925
        %945 = vmatprep.subr.bf16.mxu0 0
        %946 = vmatpush1.bf16.msra.mxu0 %v924
        %947 = vmatprep.subr.bf16.mxu0 0
        %948 = vmatpush1.bf16.msra.mxu0 %v923
        %949 = vmatprep.subr.bf16.mxu0 0
        %950 = vmatpush1.bf16.msra.mxu0 %v922
        %951 = vmatprep.subr.bf16.mxu0 0
        %952 = vmatpush1.bf16.msra.mxu0 %v921
        %953 = vmatprep.subr.bf16.mxu0 0
        %954 = vmatpush2.bf16.msra.mxu0 0
        %955 = vmatprep.subr.bf16.mxu0 0
        %956 = vmatpush2.bf16.msra.mxu0 0
        %957 = vmatprep.subr.bf16.mxu0 0
        %958 = vmatpush2.bf16.msra.mxu0 0
        %959 = vmatprep.subr.bf16.mxu0 0
        %960 = vmatpush2.bf16.msra.mxu0 0
        %961 = vmatprep.subr.bf16.mxu0 0
        %962 = vmatpush2.bf16.msra.mxu0 0
        %963 = vmatprep.subr.bf16.mxu0 0
        %964 = vmatpush2.bf16.msra.mxu0 0
        %965 = vmatprep.subr.bf16.mxu0 0
        %966 = vmatpush2.bf16.msra.mxu0 0
        %967 = vmatprep.subr.bf16.mxu0 0
        %968 = vmatpush2.bf16.msra.mxu0 0
        %969 = vmatprep.mubr.bf16.mxu0 0
        %970 = vmatmul.mubr.bf16.gmra.mxu0 %v851
        %v971 = vpop.f32.mrf.mxu0
        %v972 = vadd.f32 0.0, %v971
        %v973 = vpop.f32.mrf.mxu0
        %v974 = vpop.f32.mrf.mxu0
        %v975 = vpop.f32.mrf.mxu0
        %976 = vdwg.mxu0
        %v993 = vunpack.c.l.b16 %v857
        %v994 = vunpack.c.l.b16 %v858
        %v995 = vunpack.c.l.b16 %v859
        %v996 = vunpack.c.l.b16 %v860
        %v997 = vunpack.c.l.b16 %v861
        %v998 = vunpack.c.l.b16 %v862
        %v999 = vunpack.c.l.b16 %v863
        %v1000 = vunpack.c.l.b16 %v864
        %v1001 = vunpack.c.l.b16 %v865
        %v1002 = vunpack.c.l.b16 %v866
        %v1003 = vunpack.c.l.b16 %v867
        %v1004 = vunpack.c.l.b16 %v868
        %v1005 = vunpack.c.l.b16 %v869
        %v1006 = vunpack.c.l.b16 %v870
        %v1007 = vunpack.c.l.b16 %v871
        %v1008 = vunpack.c.l.b16 %v872
        %v1009 = vpack.c.b16 %v994, %v993
        %v1010 = vpack.c.b16 %v996, %v995
        %v1011 = vpack.c.b16 %v998, %v997
        %v1012 = vpack.c.b16 %v1000, %v999
        %v1013 = vpack.c.b16 %v1002, %v1001
        %v1014 = vpack.c.b16 %v1004, %v1003
        %v1015 = vpack.c.b16 %v1006, %v1005
        %v1016 = vpack.c.b16 %v1008, %v1007
        %1025 = vmatprep.subr.bf16.mxu0 0
        %1026 = vmatpush1.bf16.msra.mxu0 %v1016
        %1027 = vmatprep.subr.bf16.mxu0 0
        %1028 = vmatpush1.bf16.msra.mxu0 %v1015
        %1029 = vmatprep.subr.bf16.mxu0 0
        %1030 = vmatpush1.bf16.msra.mxu0 %v1014
        %1031 = vmatprep.subr.bf16.mxu0 0
        %1032 = vmatpush1.bf16.msra.mxu0 %v1013
        %1033 = vmatprep.subr.bf16.mxu0 0
        %1034 = vmatpush1.bf16.msra.mxu0 %v1012
        %1035 = vmatprep.subr.bf16.mxu0 0
        %1036 = vmatpush1.bf16.msra.mxu0 %v1011
        %1037 = vmatprep.subr.bf16.mxu0 0
        %1038 = vmatpush1.bf16.msra.mxu0 %v1010
        %1039 = vmatprep.subr.bf16.mxu0 0
        %1040 = vmatpush1.bf16.msra.mxu0 %v1009
        %1041 = vmatprep.subr.bf16.mxu0 0
        %1042 = vmatpush2.bf16.msra.mxu0 0
        %1043 = vmatprep.subr.bf16.mxu0 0
        %1044 = vmatpush2.bf16.msra.mxu0 0
        %1045 = vmatprep.subr.bf16.mxu0 0
        %1046 = vmatpush2.bf16.msra.mxu0 0
        %1047 = vmatprep.subr.bf16.mxu0 0
        %1048 = vmatpush2.bf16.msra.mxu0 0
        %1049 = vmatprep.subr.bf16.mxu0 0
        %1050 = vmatpush2.bf16.msra.mxu0 0
        %1051 = vmatprep.subr.bf16.mxu0 0
        %1052 = vmatpush2.bf16.msra.mxu0 0
        %1053 = vmatprep.subr.bf16.mxu0 0
        %1054 = vmatpush2.bf16.msra.mxu0 0
        %1055 = vmatprep.subr.bf16.mxu0 0
        %1056 = vmatpush2.bf16.msra.mxu0 0
        %1057 = vmatprep.mubr.bf16.mxu0 0
        %1058 = vmatmul.mubr.bf16.gmra.mxu0 %v856
        %v1059 = vpop.f32.mrf.mxu0
        %v1060 = vadd.f32 %v972, %v1059
        %v1061 = vpop.f32.mrf.mxu0
        %v1062 = vpop.f32.mrf.mxu0
        %v1063 = vpop.f32.mrf.mxu0
        %1064 = vdwg.mxu0
        %v1065 = vld [vmem:[%s4] sm:$0x1]
        %v1067 = vlaneseq
        %v1068 = vshrl.u32 %v1067, 7
        %v1069 = vsub.s32 0, %v1068
        %v1070 = vrot.slane %v1065, %v1069
        %v1072 = vadd.f32 %v1060, %v1070
        %v1073 = vmax.f32 %v1072, 0.0
        %v1074 = vpack.c.bf16 %v1073, %v1073
        %v1075 = vld [vmem:[#allocation10] sm:$0xf]
        %v1076 = vld [vmem:[#allocation10 + $0x4] sm:$0xf]
        %v1077 = vld [vmem:[#allocation10 + $0x8] sm:$0xf]
        %v1078 = vld [vmem:[#allocation10 + $0xc] sm:$0xf]
        %v1079 = vld [vmem:[#allocation10 + $0x10] sm:$0xf]
        %v1080 = vld [vmem:[#allocation10 + $0x14] sm:$0xf]
        %v1081 = vld [vmem:[#allocation10 + $0x18] sm:$0xf]
        %v1082 = vld [vmem:[#allocation10 + $0x1c] sm:$0xf]
        %v1083 = vld [vmem:[#allocation10 + $0x20] sm:$0xf]
        %v1084 = vld [vmem:[#allocation10 + $0x24] sm:$0xf]
        %v1085 = vld [vmem:[#allocation10 + $0x28] sm:$0xf]
        %v1086 = vld [vmem:[#allocation10 + $0x2c] sm:$0xf]
        %v1087 = vld [vmem:[#allocation10 + $0x30] sm:$0xf]
        %v1088 = vld [vmem:[#allocation10 + $0x34] sm:$0xf]
        %v1089 = vld [vmem:[#allocation10 + $0x38] sm:$0xf]
        %v1090 = vld [vmem:[#allocation10 + $0x3c] sm:$0xf]
        %v1091 = vld [vmem:[%s6] sm:$0x1]
        %v1093 = vlaneseq
        %v1094 = vshrl.u32 %v1093, 7
        %v1095 = vsub.s32 0, %v1094
        %v1096 = vrot.slane %v1091, %v1095
        %v1114 = vunpack.c.l.b16 %v1075
        %v1115 = vunpack.c.l.b16 %v1076
        %v1116 = vunpack.c.l.b16 %v1077
        %v1117 = vunpack.c.l.b16 %v1078
        %v1118 = vunpack.c.l.b16 %v1079
        %v1119 = vunpack.c.l.b16 %v1080
        %v1120 = vunpack.c.l.b16 %v1081
        %v1121 = vunpack.c.l.b16 %v1082
        %v1122 = vunpack.c.l.b16 %v1083
        %v1123 = vunpack.c.l.b16 %v1084
        %v1124 = vunpack.c.l.b16 %v1085
        %v1125 = vunpack.c.l.b16 %v1086
        %v1126 = vunpack.c.l.b16 %v1087
        %v1127 = vunpack.c.l.b16 %v1088
        %v1128 = vunpack.c.l.b16 %v1089
        %v1129 = vunpack.c.l.b16 %v1090
        %v1130 = vpack.c.b16 %v1115, %v1114
        %v1131 = vpack.c.b16 %v1117, %v1116
        %v1132 = vpack.c.b16 %v1119, %v1118
        %v1133 = vpack.c.b16 %v1121, %v1120
        %v1134 = vpack.c.b16 %v1123, %v1122
        %v1135 = vpack.c.b16 %v1125, %v1124
        %v1136 = vpack.c.b16 %v1127, %v1126
        %v1137 = vpack.c.b16 %v1129, %v1128
        %1146 = vmatprep.subr.bf16.mxu0 0
        %1147 = vmatpush1.bf16.msra.mxu0 %v1137
        %1148 = vmatprep.subr.bf16.mxu0 0
        %1149 = vmatpush1.bf16.msra.mxu0 %v1136
        %1150 = vmatprep.subr.bf16.mxu0 0
        %1151 = vmatpush1.bf16.msra.mxu0 %v1135
        %1152 = vmatprep.subr.bf16.mxu0 0
        %1153 = vmatpush1.bf16.msra.mxu0 %v1134
        %1154 = vmatprep.subr.bf16.mxu0 0
        %1155 = vmatpush1.bf16.msra.mxu0 %v1133
        %1156 = vmatprep.subr.bf16.mxu0 0
        %1157 = vmatpush1.bf16.msra.mxu0 %v1132
        %1158 = vmatprep.subr.bf16.mxu0 0
        %1159 = vmatpush1.bf16.msra.mxu0 %v1131
        %1160 = vmatprep.subr.bf16.mxu0 0
        %1161 = vmatpush1.bf16.msra.mxu0 %v1130
        %1162 = vmatprep.subr.bf16.mxu0 0
        %1163 = vmatpush2.bf16.msra.mxu0 0
        %1164 = vmatprep.subr.bf16.mxu0 0
        %1165 = vmatpush2.bf16.msra.mxu0 0
        %1166 = vmatprep.subr.bf16.mxu0 0
        %1167 = vmatpush2.bf16.msra.mxu0 0
        %1168 = vmatprep.subr.bf16.mxu0 0
        %1169 = vmatpush2.bf16.msra.mxu0 0
        %1170 = vmatprep.subr.bf16.mxu0 0
        %1171 = vmatpush2.bf16.msra.mxu0 0
        %1172 = vmatprep.subr.bf16.mxu0 0
        %1173 = vmatpush2.bf16.msra.mxu0 0
        %1174 = vmatprep.subr.bf16.mxu0 0
        %1175 = vmatpush2.bf16.msra.mxu0 0
        %1176 = vmatprep.subr.bf16.mxu0 0
        %1177 = vmatpush2.bf16.msra.mxu0 0
        %1178 = vmatprep.mubr.bf16.mxu0 0
        %1179 = vmatmul.mubr.bf16.gmra.mxu0 %v1074
        %v1180 = vpop.f32.mrf.mxu0
        %v1181 = vadd.f32 %v1096, %v1180
        %v1182 = vpop.f32.mrf.mxu0
        %v1183 = vpop.f32.mrf.mxu0
        %v1184 = vpop.f32.mrf.mxu0
        %1185 = vdwg.mxu0
        %v1186 = vmax.f32 %v1181, 0.0
        %v1187 = vpack.c.bf16 %v1186, %v1186
        %v1188 = vld [vmem:[#allocation11] sm:$0xf]
        %v1189 = vld [vmem:[#allocation11 + $0x4] sm:$0xf]
        %v1190 = vld [vmem:[#allocation11 + $0x8] sm:$0xf]
        %v1191 = vld [vmem:[#allocation11 + $0xc] sm:$0xf]
        %v1192 = vld [vmem:[#allocation11 + $0x10] sm:$0xf]
        %v1193 = vld [vmem:[#allocation11 + $0x14] sm:$0xf]
        %v1194 = vld [vmem:[#allocation11 + $0x18] sm:$0xf]
        %v1195 = vld [vmem:[#allocation11 + $0x1c] sm:$0xf]
        %v1196 = vld [vmem:[#allocation11 + $0x20] sm:$0xf]
        %v1197 = vld [vmem:[#allocation11 + $0x24] sm:$0xf]
        %v1198 = vld [vmem:[#allocation11 + $0x28] sm:$0xf]
        %v1199 = vld [vmem:[#allocation11 + $0x2c] sm:$0xf]
        %v1200 = vld [vmem:[#allocation11 + $0x30] sm:$0xf]
        %v1201 = vld [vmem:[#allocation11 + $0x34] sm:$0xf]
        %v1202 = vld [vmem:[#allocation11 + $0x38] sm:$0xf]
        %v1203 = vld [vmem:[#allocation11 + $0x3c] sm:$0xf]
        %v1204 = vld [vmem:[%s8] sm:$0x1]
        %v1206 = vlaneseq
        %v1207 = vshrl.u32 %v1206, 7
        %v1208 = vsub.s32 0, %v1207
        %v1209 = vrot.slane %v1204, %v1208
        %v1227 = vunpack.c.l.b16 %v1188
        %v1228 = vunpack.c.l.b16 %v1189
        %v1229 = vunpack.c.l.b16 %v1190
        %v1230 = vunpack.c.l.b16 %v1191
        %v1231 = vunpack.c.l.b16 %v1192
        %v1232 = vunpack.c.l.b16 %v1193
        %v1233 = vunpack.c.l.b16 %v1194
        %v1234 = vunpack.c.l.b16 %v1195
        %v1235 = vunpack.c.l.b16 %v1196
        %v1236 = vunpack.c.l.b16 %v1197
        %v1237 = vunpack.c.l.b16 %v1198
        %v1238 = vunpack.c.l.b16 %v1199
        %v1239 = vunpack.c.l.b16 %v1200
        %v1240 = vunpack.c.l.b16 %v1201
        %v1241 = vunpack.c.l.b16 %v1202
        %v1242 = vunpack.c.l.b16 %v1203
        %v1243 = vpack.c.b16 %v1228, %v1227
        %v1244 = vpack.c.b16 %v1230, %v1229
        %v1245 = vpack.c.b16 %v1232, %v1231
        %v1246 = vpack.c.b16 %v1234, %v1233
        %v1247 = vpack.c.b16 %v1236, %v1235
        %v1248 = vpack.c.b16 %v1238, %v1237
        %v1249 = vpack.c.b16 %v1240, %v1239
        %v1250 = vpack.c.b16 %v1242, %v1241
        %1259 = vmatprep.subr.bf16.mxu0 0
        %1260 = vmatpush1.bf16.msra.mxu0 %v1250
        %1261 = vmatprep.subr.bf16.mxu0 0
        %1262 = vmatpush1.bf16.msra.mxu0 %v1249
        %1263 = vmatprep.subr.bf16.mxu0 0
        %1264 = vmatpush1.bf16.msra.mxu0 %v1248
        %1265 = vmatprep.subr.bf16.mxu0 0
        %1266 = vmatpush1.bf16.msra.mxu0 %v1247
        %1267 = vmatprep.subr.bf16.mxu0 0
        %1268 = vmatpush1.bf16.msra.mxu0 %v1246
        %1269 = vmatprep.subr.bf16.mxu0 0
        %1270 = vmatpush1.bf16.msra.mxu0 %v1245
        %1271 = vmatprep.subr.bf16.mxu0 0
        %1272 = vmatpush1.bf16.msra.mxu0 %v1244
        %1273 = vmatprep.subr.bf16.mxu0 0
        %1274 = vmatpush1.bf16.msra.mxu0 %v1243
        %1275 = vmatprep.subr.bf16.mxu0 0
        %1276 = vmatpush2.bf16.msra.mxu0 0
        %1277 = vmatprep.subr.bf16.mxu0 0
        %1278 = vmatpush2.bf16.msra.mxu0 0
        %1279 = vmatprep.subr.bf16.mxu0 0
        %1280 = vmatpush2.bf16.msra.mxu0 0
        %1281 = vmatprep.subr.bf16.mxu0 0
        %1282 = vmatpush2.bf16.msra.mxu0 0
        %1283 = vmatprep.subr.bf16.mxu0 0
        %1284 = vmatpush2.bf16.msra.mxu0 0
        %1285 = vmatprep.subr.bf16.mxu0 0
        %1286 = vmatpush2.bf16.msra.mxu0 0
        %1287 = vmatprep.subr.bf16.mxu0 0
        %1288 = vmatpush2.bf16.msra.mxu0 0
        %1289 = vmatprep.subr.bf16.mxu0 0
        %1290 = vmatpush2.bf16.msra.mxu0 0
        %1291 = vmatprep.mubr.bf16.mxu0 0
        %1292 = vmatmul.mubr.bf16.gmra.mxu0 %v1187
        %v1293 = vpop.f32.mrf.mxu0
        %v1294 = vadd.f32 %v1209, %v1293
        %v1295 = vpop.f32.mrf.mxu0
        %v1296 = vpop.f32.mrf.mxu0
        %v1297 = vpop.f32.mrf.mxu0
        %1298 = vdwg.mxu0
        %v1299 = vmax.f32 %v1294, 0.0
        %v1300 = vpack.c.bf16 %v1299, %v1299
        %v1301 = vld [vmem:[#allocation13] sm:$0xf]
        %v1302 = vld [vmem:[#allocation13 + $0x4] sm:$0xf]
        %v1303 = vld [vmem:[#allocation13 + $0x8] sm:$0xf]
        %v1304 = vld [vmem:[#allocation13 + $0xc] sm:$0xf]
        %v1305 = vld [vmem:[#allocation13 + $0x10] sm:$0xf]
        %v1306 = vld [vmem:[#allocation13 + $0x14] sm:$0xf]
        %v1307 = vld [vmem:[#allocation13 + $0x18] sm:$0xf]
        %v1308 = vld [vmem:[#allocation13 + $0x1c] sm:$0xf]
        %v1309 = vld [vmem:[#allocation13 + $0x20] sm:$0xf]
        %v1310 = vld [vmem:[#allocation13 + $0x24] sm:$0xf]
        %v1311 = vld [vmem:[#allocation13 + $0x28] sm:$0xf]
        %v1312 = vld [vmem:[#allocation13 + $0x2c] sm:$0xf]
        %v1313 = vld [vmem:[#allocation13 + $0x30] sm:$0xf]
        %v1314 = vld [vmem:[#allocation13 + $0x34] sm:$0xf]
        %v1315 = vld [vmem:[#allocation13 + $0x38] sm:$0xf]
        %v1316 = vld [vmem:[#allocation13 + $0x3c] sm:$0xf]
        %v1317 = vld [vmem:[%s10] sm:$0x1]
        %v1319 = vlaneseq
        %v1320 = vshrl.u32 %v1319, 7
        %v1321 = vsub.s32 0, %v1320
        %v1322 = vrot.slane %v1317, %v1321
        %v1340 = vunpack.c.l.b16 %v1301
        %v1341 = vunpack.c.l.b16 %v1302
        %v1342 = vunpack.c.l.b16 %v1303
        %v1343 = vunpack.c.l.b16 %v1304
        %v1344 = vunpack.c.l.b16 %v1305
        %v1345 = vunpack.c.l.b16 %v1306
        %v1346 = vunpack.c.l.b16 %v1307
        %v1347 = vunpack.c.l.b16 %v1308
        %v1348 = vunpack.c.l.b16 %v1309
        %v1349 = vunpack.c.l.b16 %v1310
        %v1350 = vunpack.c.l.b16 %v1311
        %v1351 = vunpack.c.l.b16 %v1312
        %v1352 = vunpack.c.l.b16 %v1313
        %v1353 = vunpack.c.l.b16 %v1314
        %v1354 = vunpack.c.l.b16 %v1315
        %v1355 = vunpack.c.l.b16 %v1316
        %v1356 = vpack.c.b16 %v1341, %v1340
        %v1357 = vpack.c.b16 %v1343, %v1342
        %v1358 = vpack.c.b16 %v1345, %v1344
        %v1359 = vpack.c.b16 %v1347, %v1346
        %v1360 = vpack.c.b16 %v1349, %v1348
        %v1361 = vpack.c.b16 %v1351, %v1350
        %v1362 = vpack.c.b16 %v1353, %v1352
        %v1363 = vpack.c.b16 %v1355, %v1354
        %1372 = vmatprep.subr.bf16.mxu0 0
        %1373 = vmatpush1.bf16.msra.mxu0 %v1363
        %1374 = vmatprep.subr.bf16.mxu0 0
        %1375 = vmatpush1.bf16.msra.mxu0 %v1362
        %1376 = vmatprep.subr.bf16.mxu0 0
        %1377 = vmatpush1.bf16.msra.mxu0 %v1361
        %1378 = vmatprep.subr.bf16.mxu0 0
        %1379 = vmatpush1.bf16.msra.mxu0 %v1360
        %1380 = vmatprep.subr.bf16.mxu0 0
        %1381 = vmatpush1.bf16.msra.mxu0 %v1359
        %1382 = vmatprep.subr.bf16.mxu0 0
        %1383 = vmatpush1.bf16.msra.mxu0 %v1358
        %1384 = vmatprep.subr.bf16.mxu0 0
        %1385 = vmatpush1.bf16.msra.mxu0 %v1357
        %1386 = vmatprep.subr.bf16.mxu0 0
        %1387 = vmatpush1.bf16.msra.mxu0 %v1356
        %1388 = vmatprep.subr.bf16.mxu0 0
        %1389 = vmatpush2.bf16.msra.mxu0 0
        %1390 = vmatprep.subr.bf16.mxu0 0
        %1391 = vmatpush2.bf16.msra.mxu0 0
        %1392 = vmatprep.subr.bf16.mxu0 0
        %1393 = vmatpush2.bf16.msra.mxu0 0
        %1394 = vmatprep.subr.bf16.mxu0 0
        %1395 = vmatpush2.bf16.msra.mxu0 0
        %1396 = vmatprep.subr.bf16.mxu0 0
        %1397 = vmatpush2.bf16.msra.mxu0 0
        %1398 = vmatprep.subr.bf16.mxu0 0
        %1399 = vmatpush2.bf16.msra.mxu0 0
        %1400 = vmatprep.subr.bf16.mxu0 0
        %1401 = vmatpush2.bf16.msra.mxu0 0
        %1402 = vmatprep.subr.bf16.mxu0 0
        %1403 = vmatpush2.bf16.msra.mxu0 0
        %1404 = vmatprep.mubr.bf16.mxu0 0
        %1405 = vmatmul.mubr.bf16.gmra.mxu0 %v1300
        %v1406 = vpop.f32.mrf.mxu0
        %v1407 = vadd.f32 %v1322, %v1406
        %v1408 = vpop.f32.mrf.mxu0
        %v1409 = vpop.f32.mrf.mxu0
        %v1410 = vpop.f32.mrf.mxu0
        %1411 = vdwg.mxu0
        %v1412 = vmax.f32 %v1407, 0.0
        %v1413 = vpack.c.bf16 %v1412, %v1412
        %v1414 = vld [vmem:[#allocation14] sm:$0xf]
        %v1415 = vld [vmem:[#allocation14 + $0x4] sm:$0xf]
        %v1416 = vld [vmem:[#allocation14 + $0x8] sm:$0xf]
        %v1417 = vld [vmem:[#allocation14 + $0xc] sm:$0xf]
        %v1418 = vld [vmem:[#allocation14 + $0x10] sm:$0xf]
        %v1419 = vld [vmem:[#allocation14 + $0x14] sm:$0xf]
        %v1420 = vld [vmem:[#allocation14 + $0x18] sm:$0xf]
        %v1421 = vld [vmem:[#allocation14 + $0x1c] sm:$0xf]
        %v1422 = vld [vmem:[#allocation14 + $0x20] sm:$0xf]
        %v1423 = vld [vmem:[#allocation14 + $0x24] sm:$0xf]
        %v1424 = vld [vmem:[#allocation14 + $0x28] sm:$0xf]
        %v1425 = vld [vmem:[#allocation14 + $0x2c] sm:$0xf]
        %v1426 = vld [vmem:[#allocation14 + $0x30] sm:$0xf]
        %v1427 = vld [vmem:[#allocation14 + $0x34] sm:$0xf]
        %v1428 = vld [vmem:[#allocation14 + $0x38] sm:$0xf]
        %v1429 = vld [vmem:[#allocation14 + $0x3c] sm:$0xf]
        %v1430 = vld [vmem:[%s12] sm:$0x1]
        %v1432 = vlaneseq
        %v1433 = vshrl.u32 %v1432, 7
        %v1434 = vsub.s32 0, %v1433
        %v1435 = vrot.slane %v1430, %v1434
        %v1453 = vunpack.c.l.b16 %v1414
        %v1454 = vunpack.c.l.b16 %v1415
        %v1455 = vunpack.c.l.b16 %v1416
        %v1456 = vunpack.c.l.b16 %v1417
        %v1457 = vunpack.c.l.b16 %v1418
        %v1458 = vunpack.c.l.b16 %v1419
        %v1459 = vunpack.c.l.b16 %v1420
        %v1460 = vunpack.c.l.b16 %v1421
        %v1461 = vunpack.c.l.b16 %v1422
        %v1462 = vunpack.c.l.b16 %v1423
        %v1463 = vunpack.c.l.b16 %v1424
        %v1464 = vunpack.c.l.b16 %v1425
        %v1465 = vunpack.c.l.b16 %v1426
        %v1466 = vunpack.c.l.b16 %v1427
        %v1467 = vunpack.c.l.b16 %v1428
        %v1468 = vunpack.c.l.b16 %v1429
        %v1469 = vpack.c.b16 %v1454, %v1453
        %v1470 = vpack.c.b16 %v1456, %v1455
        %v1471 = vpack.c.b16 %v1458, %v1457
        %v1472 = vpack.c.b16 %v1460, %v1459
        %v1473 = vpack.c.b16 %v1462, %v1461
        %v1474 = vpack.c.b16 %v1464, %v1463
        %v1475 = vpack.c.b16 %v1466, %v1465
        %v1476 = vpack.c.b16 %v1468, %v1467
        %1485 = vmatprep.subr.bf16.mxu0 0
        %1486 = vmatpush1.bf16.msra.mxu0 %v1476
        %1487 = vmatprep.subr.bf16.mxu0 0
        %1488 = vmatpush1.bf16.msra.mxu0 %v1475
        %1489 = vmatprep.subr.bf16.mxu0 0
        %1490 = vmatpush1.bf16.msra.mxu0 %v1474
        %1491 = vmatprep.subr.bf16.mxu0 0
        %1492 = vmatpush1.bf16.msra.mxu0 %v1473
        %1493 = vmatprep.subr.bf16.mxu0 0
        %1494 = vmatpush1.bf16.msra.mxu0 %v1472
        %1495 = vmatprep.subr.bf16.mxu0 0
        %1496 = vmatpush1.bf16.msra.mxu0 %v1471
        %1497 = vmatprep.subr.bf16.mxu0 0
        %1498 = vmatpush1.bf16.msra.mxu0 %v1470
        %1499 = vmatprep.subr.bf16.mxu0 0
        %1500 = vmatpush1.bf16.msra.mxu0 %v1469
        %1501 = vmatprep.subr.bf16.mxu0 0
        %1502 = vmatpush2.bf16.msra.mxu0 0
        %1503 = vmatprep.subr.bf16.mxu0 0
        %1504 = vmatpush2.bf16.msra.mxu0 0
        %1505 = vmatprep.subr.bf16.mxu0 0
        %1506 = vmatpush2.bf16.msra.mxu0 0
        %1507 = vmatprep.subr.bf16.mxu0 0
        %1508 = vmatpush2.bf16.msra.mxu0 0
        %1509 = vmatprep.subr.bf16.mxu0 0
        %1510 = vmatpush2.bf16.msra.mxu0 0
        %1511 = vmatprep.subr.bf16.mxu0 0
        %1512 = vmatpush2.bf16.msra.mxu0 0
        %1513 = vmatprep.subr.bf16.mxu0 0
        %1514 = vmatpush2.bf16.msra.mxu0 0
        %1515 = vmatprep.subr.bf16.mxu0 0
        %1516 = vmatpush2.bf16.msra.mxu0 0
        %1517 = vmatprep.mubr.bf16.mxu0 0
        %1518 = vmatmul.mubr.bf16.gmra.mxu0 %v1413
        %v1519 = vpop.f32.mrf.mxu0
        %v1520 = vadd.f32 %v1435, %v1519
        %v1521 = vpop.f32.mrf.mxu0
        %v1522 = vpop.f32.mrf.mxu0
        %v1523 = vpop.f32.mrf.mxu0
        %1524 = vdwg.mxu0
        %v1525 = vmax.f32 %v1520, 0.0
        %v1526 = vpack.c.bf16 %v1525, %v1525
        %v1527 = vld [vmem:[#allocation16] sm:$0xf]
        %v1528 = vld [vmem:[#allocation16 + $0x4] sm:$0xf]
        %v1529 = vld [vmem:[#allocation16 + $0x8] sm:$0xf]
        %v1530 = vld [vmem:[#allocation16 + $0xc] sm:$0xf]
        %v1531 = vld [vmem:[#allocation16 + $0x10] sm:$0xf]
        %v1532 = vld [vmem:[#allocation16 + $0x14] sm:$0xf]
        %v1533 = vld [vmem:[#allocation16 + $0x18] sm:$0xf]
        %v1534 = vld [vmem:[#allocation16 + $0x1c] sm:$0xf]
        %v1535 = vld [vmem:[#allocation16 + $0x20] sm:$0xf]
        %v1536 = vld [vmem:[#allocation16 + $0x24] sm:$0xf]
        %v1537 = vld [vmem:[#allocation16 + $0x28] sm:$0xf]
        %v1538 = vld [vmem:[#allocation16 + $0x2c] sm:$0xf]
        %v1539 = vld [vmem:[#allocation16 + $0x30] sm:$0xf]
        %v1540 = vld [vmem:[#allocation16 + $0x34] sm:$0xf]
        %v1541 = vld [vmem:[#allocation16 + $0x38] sm:$0xf]
        %v1542 = vld [vmem:[#allocation16 + $0x3c] sm:$0xf]
        %v1543 = vld [vmem:[%s14] sm:$0x1]
        %v1545 = vlaneseq
        %v1546 = vshrl.u32 %v1545, 7
        %v1547 = vsub.s32 0, %v1546
        %v1548 = vrot.slane %v1543, %v1547
        %v1566 = vunpack.c.l.b16 %v1527
        %v1567 = vunpack.c.l.b16 %v1528
        %v1568 = vunpack.c.l.b16 %v1529
        %v1569 = vunpack.c.l.b16 %v1530
        %v1570 = vunpack.c.l.b16 %v1531
        %v1571 = vunpack.c.l.b16 %v1532
        %v1572 = vunpack.c.l.b16 %v1533
        %v1573 = vunpack.c.l.b16 %v1534
        %v1574 = vunpack.c.l.b16 %v1535
        %v1575 = vunpack.c.l.b16 %v1536
        %v1576 = vunpack.c.l.b16 %v1537
        %v1577 = vunpack.c.l.b16 %v1538
        %v1578 = vunpack.c.l.b16 %v1539
        %v1579 = vunpack.c.l.b16 %v1540
        %v1580 = vunpack.c.l.b16 %v1541
        %v1581 = vunpack.c.l.b16 %v1542
        %v1582 = vpack.c.b16 %v1567, %v1566
        %v1583 = vpack.c.b16 %v1569, %v1568
        %v1584 = vpack.c.b16 %v1571, %v1570
        %v1585 = vpack.c.b16 %v1573, %v1572
        %v1586 = vpack.c.b16 %v1575, %v1574
        %v1587 = vpack.c.b16 %v1577, %v1576
        %v1588 = vpack.c.b16 %v1579, %v1578
        %v1589 = vpack.c.b16 %v1581, %v1580
        %1598 = vmatprep.subr.bf16.mxu0 0
        %1599 = vmatpush1.bf16.msra.mxu0 %v1589
        %1600 = vmatprep.subr.bf16.mxu0 0
        %1601 = vmatpush1.bf16.msra.mxu0 %v1588
        %1602 = vmatprep.subr.bf16.mxu0 0
        %1603 = vmatpush1.bf16.msra.mxu0 %v1587
        %1604 = vmatprep.subr.bf16.mxu0 0
        %1605 = vmatpush1.bf16.msra.mxu0 %v1586
        %1606 = vmatprep.subr.bf16.mxu0 0
        %1607 = vmatpush1.bf16.msra.mxu0 %v1585
        %1608 = vmatprep.subr.bf16.mxu0 0
        %1609 = vmatpush1.bf16.msra.mxu0 %v1584
        %1610 = vmatprep.subr.bf16.mxu0 0
        %1611 = vmatpush1.bf16.msra.mxu0 %v1583
        %1612 = vmatprep.subr.bf16.mxu0 0
        %1613 = vmatpush1.bf16.msra.mxu0 %v1582
        %1614 = vmatprep.subr.bf16.mxu0 0
        %1615 = vmatpush2.bf16.msra.mxu0 0
        %1616 = vmatprep.subr.bf16.mxu0 0
        %1617 = vmatpush2.bf16.msra.mxu0 0
        %1618 = vmatprep.subr.bf16.mxu0 0
        %1619 = vmatpush2.bf16.msra.mxu0 0
        %1620 = vmatprep.subr.bf16.mxu0 0
        %1621 = vmatpush2.bf16.msra.mxu0 0
        %1622 = vmatprep.subr.bf16.mxu0 0
        %1623 = vmatpush2.bf16.msra.mxu0 0
        %1624 = vmatprep.subr.bf16.mxu0 0
        %1625 = vmatpush2.bf16.msra.mxu0 0
        %1626 = vmatprep.subr.bf16.mxu0 0
        %1627 = vmatpush2.bf16.msra.mxu0 0
        %1628 = vmatprep.subr.bf16.mxu0 0
        %1629 = vmatpush2.bf16.msra.mxu0 0
        %1630 = vmatprep.mubr.bf16.mxu0 0
        %1631 = vmatmul.mubr.bf16.gmra.mxu0 %v1526
        %v1632 = vpop.f32.mrf.mxu0
        %v1633 = vadd.f32 %v1548, %v1632
        %v1634 = vpop.f32.mrf.mxu0
        %v1635 = vpop.f32.mrf.mxu0
        %v1636 = vpop.f32.mrf.mxu0
        %1637 = vdwg.mxu0
        %v1638 = vld [vmem:[%s19] sm:$0x7]
        %v1639 = vmax.f32 %v1633, 0.0
        %vm1640 = vcmp.gt.f32.partialorder %v1638, 0.0
        %v1641 = vsel %vm1640, 1, 0
        %v1642 = vlaneseq
        %v1643 = vshrl.u32 %v1642, 7
        %v1644 = vsub.s32 0, %v1643
        %v1645 = vrot.slane %v1641, %v1644
        %vm1646 = vcmp.eq.s32.totalorder %v1645, 1
        %v1647 = vsel %vm1646, %v1639, %v1633
        %v1648 = vxor.u32 %v1633, 2147483648
        %v1649 = vmul.f32 %v1648, 1.442695
        %v1650 = vpow.pop %v1649
        %v1651 = vadd.f32 %v1650, 1.0
        %v1652 = vrcp.pop %v1651
        %v1653 = vmul.f32 1.0, %v1652
        %v1654 = vlaneseq
        %v1655 = vshrl.u32 %v1654, 7
        %v1656 = vsub.s32 1, %v1655
        %v1657 = vrot.slane %v1641, %v1656
        %vm1658 = vcmp.eq.s32.totalorder %v1657, 1
        %v1659 = vsel %vm1658, %v1653, %v1647
        %v1660 = vlaneseq
        %v1661 = vshrl.u32 %v1660, 7
        %v1662 = vsub.s32 2, %v1661
        %v1663 = vrot.slane %v1641, %v1662
        %vm1664 = vcmp.eq.s32.totalorder %v1663, 1
        %v1665 = vsel %vm1664, 1.0, %v1659
        %1666 = vst [vmem:[%s842] sm:$0xff] %v1665
        %v1667 = vld [vmem:[#allocation17] sm:$0xf]
        %v1668 = vld [vmem:[#allocation17 + $0x4] sm:$0xf]
        %v1669 = vld [vmem:[#allocation17 + $0x8] sm:$0xf]
        %v1670 = vld [vmem:[#allocation17 + $0xc] sm:$0xf]
        %v1671 = vld [vmem:[#allocation17 + $0x10] sm:$0xf]
        %v1672 = vld [vmem:[#allocation17 + $0x14] sm:$0xf]
        %v1673 = vld [vmem:[#allocation17 + $0x18] sm:$0xf]
        %v1674 = vld [vmem:[#allocation17 + $0x1c] sm:$0xf]
        %v1675 = vld [vmem:[#allocation17 + $0x20] sm:$0xf]
        %v1676 = vld [vmem:[#allocation17 + $0x24] sm:$0xf]
        %v1677 = vld [vmem:[#allocation17 + $0x28] sm:$0xf]
        %v1678 = vld [vmem:[#allocation17 + $0x2c] sm:$0xf]
        %v1679 = vld [vmem:[#allocation17 + $0x30] sm:$0xf]
        %v1680 = vld [vmem:[#allocation17 + $0x34] sm:$0xf]
        %v1681 = vld [vmem:[#allocation17 + $0x38] sm:$0xf]
        %v1682 = vld [vmem:[#allocation17 + $0x3c] sm:$0xf]
        %v1683 = vld [vmem:[%s16] sm:$0x1]
        %v1685 = vlaneseq
        %v1686 = vshrl.u32 %v1685, 7
        %v1687 = vsub.s32 0, %v1686
        %v1688 = vrot.slane %v1683, %v1687
        %v1706 = vunpack.c.l.b16 %v1667
        %v1707 = vunpack.c.l.b16 %v1668
        %v1708 = vunpack.c.l.b16 %v1669
        %v1709 = vunpack.c.l.b16 %v1670
        %v1710 = vunpack.c.l.b16 %v1671
        %v1711 = vunpack.c.l.b16 %v1672
        %v1712 = vunpack.c.l.b16 %v1673
        %v1713 = vunpack.c.l.b16 %v1674
        %v1714 = vunpack.c.l.b16 %v1675
        %v1715 = vunpack.c.l.b16 %v1676
        %v1716 = vunpack.c.l.b16 %v1677
        %v1717 = vunpack.c.l.b16 %v1678
        %v1718 = vunpack.c.l.b16 %v1679
        %v1719 = vunpack.c.l.b16 %v1680
        %v1720 = vunpack.c.l.b16 %v1681
        %v1721 = vunpack.c.l.b16 %v1682
        %v1722 = vpack.c.b16 %v1707, %v1706
        %v1723 = vpack.c.b16 %v1709, %v1708
        %v1724 = vpack.c.b16 %v1711, %v1710
        %v1725 = vpack.c.b16 %v1713, %v1712
        %v1726 = vpack.c.b16 %v1715, %v1714
        %v1727 = vpack.c.b16 %v1717, %v1716
        %v1728 = vpack.c.b16 %v1719, %v1718
        %v1729 = vpack.c.b16 %v1721, %v1720
        %1738 = vmatprep.subr.bf16.mxu0 0
        %1739 = vmatpush1.bf16.msra.mxu0 %v1729
        %1740 = vmatprep.subr.bf16.mxu0 0
        %1741 = vmatpush1.bf16.msra.mxu0 %v1728
        %1742 = vmatprep.subr.bf16.mxu0 0
        %1743 = vmatpush1.bf16.msra.mxu0 %v1727
        %1744 = vmatprep.subr.bf16.mxu0 0
        %1745 = vmatpush1.bf16.msra.mxu0 %v1726
        %1746 = vmatprep.subr.bf16.mxu0 0
        %1747 = vmatpush1.bf16.msra.mxu0 %v1725
        %1748 = vmatprep.subr.bf16.mxu0 0
        %1749 = vmatpush1.bf16.msra.mxu0 %v1724
        %1750 = vmatprep.subr.bf16.mxu0 0
        %1751 = vmatpush1.bf16.msra.mxu0 %v1723
        %1752 = vmatprep.subr.bf16.mxu0 0
        %1753 = vmatpush1.bf16.msra.mxu0 %v1722
        %1754 = vmatprep.subr.bf16.mxu0 0
        %1755 = vmatpush2.bf16.msra.mxu0 0
        %1756 = vmatprep.subr.bf16.mxu0 0
        %1757 = vmatpush2.bf16.msra.mxu0 0
        %1758 = vmatprep.subr.bf16.mxu0 0
        %1759 = vmatpush2.bf16.msra.mxu0 0
        %1760 = vmatprep.subr.bf16.mxu0 0
        %1761 = vmatpush2.bf16.msra.mxu0 0
        %1762 = vmatprep.subr.bf16.mxu0 0
        %1763 = vmatpush2.bf16.msra.mxu0 0
        %1764 = vmatprep.subr.bf16.mxu0 0
        %1765 = vmatpush2.bf16.msra.mxu0 0
        %1766 = vmatprep.subr.bf16.mxu0 0
        %1767 = vmatpush2.bf16.msra.mxu0 0
        %1768 = vmatprep.subr.bf16.mxu0 0
        %1769 = vmatpush2.bf16.msra.mxu0 0
        %1770 = vmatprep.mubr.bf16.mxu0 0
        %1771 = vmatmul.mubr.bf16.gmra.mxu0 %v1300
        %v1772 = vpop.f32.mrf.mxu0
        %v1773 = vadd.f32 %v1688, %v1772
        %v1774 = vpop.f32.mrf.mxu0
        %v1775 = vpop.f32.mrf.mxu0
        %v1776 = vpop.f32.mrf.mxu0
        %1777 = vdwg.mxu0
        %v1778 = vmax.f32 %v1773, 0.0
        %v1779 = vpack.c.bf16 %v1778, %v1778
        %v1780 = vld [vmem:[#allocation19] sm:$0xf]
        %v1781 = vld [vmem:[#allocation19 + $0x4] sm:$0xf]
        %v1782 = vld [vmem:[#allocation19 + $0x8] sm:$0xf]
        %v1783 = vld [vmem:[#allocation19 + $0xc] sm:$0xf]
        %v1784 = vld [vmem:[#allocation19 + $0x10] sm:$0xf]
        %v1785 = vld [vmem:[#allocation19 + $0x14] sm:$0xf]
        %v1786 = vld [vmem:[#allocation19 + $0x18] sm:$0xf]
        %v1787 = vld [vmem:[#allocation19 + $0x1c] sm:$0xf]
        %v1788 = vld [vmem:[#allocation19 + $0x20] sm:$0xf]
        %v1789 = vld [vmem:[#allocation19 + $0x24] sm:$0xf]
        %v1790 = vld [vmem:[#allocation19 + $0x28] sm:$0xf]
        %v1791 = vld [vmem:[#allocation19 + $0x2c] sm:$0xf]
        %v1792 = vld [vmem:[#allocation19 + $0x30] sm:$0xf]
        %v1793 = vld [vmem:[#allocation19 + $0x34] sm:$0xf]
        %v1794 = vld [vmem:[#allocation19 + $0x38] sm:$0xf]
        %v1795 = vld [vmem:[#allocation19 + $0x3c] sm:$0xf]
        %v1796 = vld [vmem:[%s18] sm:$0x1]
        %v1798 = vlaneseq
        %v1799 = vshrl.u32 %v1798, 7
        %v1800 = vsub.s32 0, %v1799
        %v1801 = vrot.slane %v1796, %v1800
        %v1819 = vunpack.c.l.b16 %v1780
        %v1820 = vunpack.c.l.b16 %v1781
        %v1821 = vunpack.c.l.b16 %v1782
        %v1822 = vunpack.c.l.b16 %v1783
        %v1823 = vunpack.c.l.b16 %v1784
        %v1824 = vunpack.c.l.b16 %v1785
        %v1825 = vunpack.c.l.b16 %v1786
        %v1826 = vunpack.c.l.b16 %v1787
        %v1827 = vunpack.c.l.b16 %v1788
        %v1828 = vunpack.c.l.b16 %v1789
        %v1829 = vunpack.c.l.b16 %v1790
        %v1830 = vunpack.c.l.b16 %v1791
        %v1831 = vunpack.c.l.b16 %v1792
        %v1832 = vunpack.c.l.b16 %v1793
        %v1833 = vunpack.c.l.b16 %v1794
        %v1834 = vunpack.c.l.b16 %v1795
        %v1835 = vpack.c.b16 %v1820, %v1819
        %v1836 = vpack.c.b16 %v1822, %v1821
        %v1837 = vpack.c.b16 %v1824, %v1823
        %v1838 = vpack.c.b16 %v1826, %v1825
        %v1839 = vpack.c.b16 %v1828, %v1827
        %v1840 = vpack.c.b16 %v1830, %v1829
        %v1841 = vpack.c.b16 %v1832, %v1831
        %v1842 = vpack.c.b16 %v1834, %v1833
        %1851 = vmatprep.subr.bf16.mxu0 0
        %1852 = vmatpush1.bf16.msra.mxu0 %v1842
        %1853 = vmatprep.subr.bf16.mxu0 0
        %1854 = vmatpush1.bf16.msra.mxu0 %v1841
        %1855 = vmatprep.subr.bf16.mxu0 0
        %1856 = vmatpush1.bf16.msra.mxu0 %v1840
        %1857 = vmatprep.subr.bf16.mxu0 0
        %1858 = vmatpush1.bf16.msra.mxu0 %v1839
        %1859 = vmatprep.subr.bf16.mxu0 0
        %1860 = vmatpush1.bf16.msra.mxu0 %v1838
        %1861 = vmatprep.subr.bf16.mxu0 0
        %1862 = vmatpush1.bf16.msra.mxu0 %v1837
        %1863 = vmatprep.subr.bf16.mxu0 0
        %1864 = vmatpush1.bf16.msra.mxu0 %v1836
        %1865 = vmatprep.subr.bf16.mxu0 0
        %1866 = vmatpush1.bf16.msra.mxu0 %v1835
        %1867 = vmatprep.subr.bf16.mxu0 0
        %1868 = vmatpush2.bf16.msra.mxu0 0
        %1869 = vmatprep.subr.bf16.mxu0 0
        %1870 = vmatpush2.bf16.msra.mxu0 0
        %1871 = vmatprep.subr.bf16.mxu0 0
        %1872 = vmatpush2.bf16.msra.mxu0 0
        %1873 = vmatprep.subr.bf16.mxu0 0
        %1874 = vmatpush2.bf16.msra.mxu0 0
        %1875 = vmatprep.subr.bf16.mxu0 0
        %1876 = vmatpush2.bf16.msra.mxu0 0
        %1877 = vmatprep.subr.bf16.mxu0 0
        %1878 = vmatpush2.bf16.msra.mxu0 0
        %1879 = vmatprep.subr.bf16.mxu0 0
        %1880 = vmatpush2.bf16.msra.mxu0 0
        %1881 = vmatprep.subr.bf16.mxu0 0
        %1882 = vmatpush2.bf16.msra.mxu0 0
        %1883 = vmatprep.mubr.bf16.mxu0 0
        %1884 = vmatmul.mubr.bf16.gmra.mxu0 %v1779
        %v1885 = vpop.f32.mrf.mxu0
        %v1886 = vadd.f32 %v1801, %v1885
        %v1887 = vpop.f32.mrf.mxu0
        %v1888 = vpop.f32.mrf.mxu0
        %v1889 = vpop.f32.mrf.mxu0
        %1890 = vdwg.mxu0
        %v1891 = vxor.u32 %v1886, 2147483648
        %v1892 = vmul.f32 %v1891, 1.442695
        %v1893 = vpow.pop %v1892
        %v1894 = vadd.f32 %v1893, 1.0
        %v1895 = vrcp.pop %v1894
        %v1896 = vmul.f32 1.0, %v1895
        %v1897 = vpack.c.bf16 %v1896, %v1896
        %1898 = vst [vmem:[%s849] sm:$0xf] %v1897
        %s1899 = sand.u32 %s487, 1
        %s1900 = scalar_lea.sflag [#allocation4], %s1899
        %s1901 = sand.u32 %s487, 1
        %s1902 = smul.addr %s1901, 8
        %s1903 = scalar_lea.vmem [#allocation20], %s1902
        %s1904 = sand.u32 %s513, 1
        %s1905 = scalar_lea.sflag [#allocation22], %s1904
        %s1906 = sand.u32 %s513, 1
        %s1907 = smul.addr %s1906, 4
        %s1908 = scalar_lea.vmem [#allocation21], %s1907
        // Predicated region
        $region145: #{tpu_custom_call.1} parent=99 // pred_check
          %p1909 = pneg %p497
        $region146: #{tpu_custom_call.1} parent=99 // pred_check_branch
          %1911 = sbr.rel (%p1909) target = $region148
        $region147: #{tpu_custom_call.1} parent=99 // pred_region
          %s1913 = ssub.s32 128, 128
          %1914 = vsyncadd %s1900, %s1913
          %s1915 = smul.addr %s49, 128
          %s1916 = scalar_lea.hbm %s20, %s1915
          %s1918 = sshll.u32 %s1903, 4
          %s1919 = int_to_ptr.vmem [resolvable:$true] %s1918
          %1921 = dma.vmem_to_hbm [thread:$0]  %s1919, 128, %s1916, %s1900
        $region148: #{tpu_custom_call.1} parent=99 // pred_fallthru
          _
        // Predicated region
        $region149: #{tpu_custom_call.1} parent=99 // pred_check
          %p1922 = pneg %p523
        $region150: #{tpu_custom_call.1} parent=99 // pred_check_branch
          %1924 = sbr.rel (%p1922) target = $region152
        $region151: #{tpu_custom_call.1} parent=99 // pred_region
          %s1926 = ssub.s32 64, 64
          %1927 = vsyncadd %s1905, %s1926
          %s1928 = smul.addr %s49, 64
          %s1929 = scalar_lea.hbm %s21, %s1928
          %s1931 = sshll.u32 %s1908, 4
          %s1932 = int_to_ptr.vmem [resolvable:$true] %s1931
          %1934 = dma.vmem_to_hbm [thread:$0]  %s1932, 64, %s1929, %s1905
        $region152: #{tpu_custom_call.1} parent=99 // pred_fallthru
          _
      $region100: #{tpu_custom_call.1} parent=5 // pred_fallthru
        _
      %p1935 = scmp.le.s32.totalorder 2, %s44
      // Predicated region
      $region153: #{tpu_custom_call.1} parent=5 // pred_check
        %p1936 = pneg %p1935
      $region154: #{tpu_custom_call.1} parent=5 // pred_check_branch
        %1938 = sbr.rel (%p1936) target = $region156
      $region155: #{tpu_custom_call.1} parent=5 // pred_region
        %s1939 = ssub.s32 %s44, 2
        // Predicated region
        $region157: #{tpu_custom_call.1} parent=155 // pred_check
          %p1940 = pneg %p503
        $region158: #{tpu_custom_call.1} parent=155 // pred_check_branch
          %1942 = sbr.rel (%p1940) target = $region160
        $region159: #{tpu_custom_call.1} parent=155 // pred_region
          %s1943 = sand.u32 %s488, 1
          %s1944 = scalar_lea.sflag [#allocation4], %s1943
          %s1945 = sand.u32 %s488, 1
          %s1946 = smul.addr %s1945, 8
          %s1947 = scalar_lea.vmem [#allocation20], %s1946
          %1948 = dma.done %s1944, 128
        $region160: #{tpu_custom_call.1} parent=155 // pred_fallthru
          _
        // Predicated region
        $region161: #{tpu_custom_call.1} parent=155 // pred_check
          %p1949 = pneg %p529
        $region162: #{tpu_custom_call.1} parent=155 // pred_check_branch
          %1951 = sbr.rel (%p1949) target = $region164
        $region163: #{tpu_custom_call.1} parent=155 // pred_region
          %s1952 = sand.u32 %s514, 1
          %s1953 = scalar_lea.sflag [#allocation22], %s1952
          %s1954 = sand.u32 %s514, 1
          %s1955 = smul.addr %s1954, 4
          %s1956 = scalar_lea.vmem [#allocation21], %s1955
          %1957 = dma.done %s1953, 64
        $region164: #{tpu_custom_call.1} parent=155 // pred_fallthru
          _
      $region156: #{tpu_custom_call.1} parent=5 // pred_fallthru
        _
    $region6: #{tpu_custom_call.1} parent=1 // loop_footer
      %s48 = sadd.s32 1, %s44
    $region7: #{tpu_custom_call.1} parent=1 // loop_footer_branch
      %43 = sbr.rel target = $region3
    $region8: #{tpu_custom_call.1} parent=1 // loop_exit
      _
    %1958 = vsyncpa [#allocation3], 1
    %s1959 = scalar_lea.sflag [#allocation3], 1
    %1960 = vsyncpa %s1959, 1
    %1961 = vsyncpa [#allocation6], 1
    %s1962 = scalar_lea.sflag [#allocation6], 1
    %1963 = vsyncpa %s1962, 1
    %1964 = vsyncpa [#allocation9], 1
    %1965 = vsyncpa [#allocation12], 1
    %1966 = vsyncpa [#allocation15], 1
    %1967 = vsyncpa [#allocation18], 1
    %1968 = vsyncpa [#allocation4], 1
    %s1969 = scalar_lea.sflag [#allocation4], 1
    %1970 = vsyncpa %s1969, 1
    %1971 = vsyncpa [#allocation22], 1
    %s1972 = scalar_lea.sflag [#allocation22], 1
    %1973 = vsyncpa %s1972, 1

</llo_original>
